<compile_context>
chip_gen: v7x
topology: tpu7x:2x2x1
jax: 0.10.0
libtpu: 0.0.40
codegen_flags: <defaults>
</compile_context>

<pallas_src>
import math

import numpy as np
import jax
import jax.numpy as jnp
from jax.experimental import pallas as pl
from jax.experimental.pallas import tpu as pltpu

NHEAD = 4
D_MODEL = 32
D_K = D_MODEL // NHEAD
DW = NHEAD * D_MODEL            # 128: width of the tiled / rotated q, k, v blocks


def _mha_fused_kernel(x_ref, wbig_ref, bbig_ref, hb_ref, rsum_ref,
                      wor_ref, mask_ref, perm_ref, bo_ref, o_ref):
    f32 = jnp.float32

    # Fused q/k/v projection: [R, 96] @ [96, 384] -> [R, 384], laid out as
    #   lanes   0:128  q tiled 4x (1/sqrt(d_k) pre-folded into the weight/bias)
    #   lanes 128:256  k rotated left by r*d_k, r = 0..3
    #   lanes 256:384  v rotated left by r*d_k, r = 0..3
    y = jnp.dot(x_ref[...], wbig_ref[...], preferred_element_type=f32) + bbig_ref[...]
    qt = y[:, 0:DW]
    kr = y[:, DW:2 * DW]
    vr = y[:, 2 * DW:3 * DW]

    # Head-mixing "attention" with raw scaled scores, entirely on 128-lane-dense vregs:
    #   s128[s, r*32 + h*d_k + d] = <q_h, k_{(h+r)%H}>          (block-diag ones matmul)
    #   z                         = s128 * v_{(h+r)%H}
    #   acc[s, h*d_k + d]         = sum_r z[s, r*32 + h*d_k+d]   (r-block summing matmul)
    s128 = jnp.dot(qt * kr, hb_ref[...], preferred_element_type=f32)
    acc = jnp.dot(s128 * vr, rsum_ref[...], preferred_element_type=f32)      # [R, 32]

    # Head scramble (view -> transpose(1,2) -> view) fused with the output projection.
    # For each head offset delta: keep lane block (row%H + delta)%H of acc, project it with a
    # row-rolled copy of W_o, and route rows to their scrambled destinations via a 0/1
    # permutation matmul.  No scratch buffer, no sub-(8,128) stores, no value reshapes.
    out = None
    for delta in range(NHEAD):
        c = jnp.dot(acc * mask_ref[delta], wor_ref[delta], preferred_element_type=f32)
        pc = jnp.dot(perm_ref[delta], c, preferred_element_type=f32)
        out = pc if out is None else out + pc
    o_ref[...] = (out + bo_ref[...]).astype(o_ref.dtype)


def _scramble_constants(tb, seq):
    """Per-block masks / permutations implementing x.transpose(1,2).reshape(-1, D)."""
    rows_total = tb * seq
    sph = seq // NHEAD                       # rows per head in the scrambled layout
    rows = np.arange(rows_total)
    cols = np.arange(D_MODEL)
    masks = np.zeros((NHEAD, rows_total, D_MODEL), np.float32)
    perms = np.zeros((NHEAD, rows_total, rows_total), np.float32)
    for delta in range(NHEAD):
        hsel = (rows % NHEAD + delta) % NHEAD
        masks[delta] = (cols[None, :] // D_K == hsel[:, None]).astype(np.float32)
        b = rows // seq
        r_in = rows % seq
        h = r_in // sph
        u = r_in % sph
        src = b * seq + u * NHEAD + (h - delta) % NHEAD
        perms[delta, rows, src] = 1.0
    return jnp.asarray(masks), jnp.asarray(perms)


def multi_head_attention(query, key, value, kparams, mask=None):
    # TODO(synk): mask path not implemented; mask=None only (fails loudly otherwise).
    assert mask is None
    B, S, D = query.shape
    assert D == D_MODEL
    assert S % NHEAD == 0                    # required by the fused head scramble

    # Row blocking: >=2 grid steps when B allows it (keeps both v7x TensorCores busy),
    # each step as large as possible (amortizes grid / DMA / MXU-setup overhead).
    tb = B // 2 if (B >= 2 and B % 2 == 0) else 1
    n_steps = B // tb
    R = tb * S

    # Single lane-concatenated activation stream (one DMA stream, one fused projection).
    x2 = jnp.concatenate([query, key, value], axis=-1).reshape(B * S, 3 * D)
    masks, perms = _scramble_constants(tb, S)

    flops = 2 * B * S * (3 * D * 3 * DW + DW * DW + DW * D + NHEAD * D * D + NHEAD * R * D)
    bytes_accessed = 4 * (B * S * 4 * D                       # x2 + output
                          + 3 * D * 3 * DW + 3 * DW           # wbig + bbig
                          + DW * DW + DW * D                  # hb128 + rsum
                          + NHEAD * D * D + D                 # rolled wo + bo
                          + NHEAD * R * D + NHEAD * R * R)    # masks + perms

    inv2 = lambda i: (0, 0)
    inv3 = lambda i: (0, 0, 0)
    out2 = pl.pallas_call(
        _mha_fused_kernel,
        out_shape=jax.ShapeDtypeStruct((B * S, D), query.dtype),
        grid=(n_steps,),
        in_specs=[pl.BlockSpec((R, 3 * D), lambda i: (i, 0)),        # q|k|v activations
                  pl.BlockSpec((3 * D, 3 * DW), inv2),               # fused projection weight
                  pl.BlockSpec((1, 3 * DW), inv2),                   # fused projection bias
                  pl.BlockSpec((DW, DW), inv2),                      # block-diag head reducer
                  pl.BlockSpec((DW, D), inv2),                       # r-block summer
                  pl.BlockSpec((NHEAD, D, D), inv3),                 # row-rolled W_o copies
                  pl.BlockSpec((NHEAD, R, D), inv3),                 # scramble masks
                  pl.BlockSpec((NHEAD, R, R), inv3),                 # scramble permutations
                  pl.BlockSpec((1, D), inv2)],                       # output bias
        out_specs=pl.BlockSpec((R, D), lambda i: (i, 0)),
        compiler_params=pltpu.CompilerParams(dimension_semantics=("parallel",)),
        cost_estimate=pl.CostEstimate(flops=flops, transcendentals=0,
                                      bytes_accessed=bytes_accessed),
    )(x2, kparams["wbig"], kparams["bbig"], kparams["hb128"], kparams["rsum"],
      kparams["wo_rolled"], masks, perms, kparams["bo"])
    return out2.reshape(B, S, D)


def prepare_params(params):
    """One-time packing: fused block-diagonal projection weight with the q-tiling and k/v head
    rotations folded in, 1/sqrt(d_k) folded into q, plus the constant reduce/roll matrices."""
    scale = 1.0 / math.sqrt(D_K)

    def expand(w, b, rotate):
        # [D, D]/[1, D] -> [D, 4D]/[1, 4D]; lane block r holds columns rotated left by r*d_k.
        ws, bs = [], []
        for r in range(NHEAD):
            sh = r * D_K if rotate else 0
            ws.append(jnp.roll(w, -sh, axis=1))
            bs.append(jnp.roll(b, -sh, axis=1))
        return jnp.concatenate(ws, axis=1), jnp.concatenate(bs, axis=1)

    wqt, bqt = expand(params["wq_t"] * scale, params["bq"] * scale, rotate=False)
    wkr, bkr = expand(params["wk_t"], params["bk"], rotate=True)
    wvr, bvr = expand(params["wv_t"], params["bv"], rotate=True)

    z = jnp.zeros((D_MODEL, DW), jnp.float32)
    wbig = jnp.concatenate([jnp.concatenate([wqt, z, z], axis=1),
                            jnp.concatenate([z, wkr, z], axis=1),
                            jnp.concatenate([z, z, wvr], axis=1)], axis=0)   # [96, 384]
    bbig = jnp.concatenate([bqt, bkr, bvr], axis=1)                          # [1, 384]

    i = np.arange(DW)
    hb128 = jnp.asarray((i[:, None] // D_K == i[None, :] // D_K).astype(np.float32))  # [128,128]
    rsum = jnp.asarray((i[:, None] % D_MODEL ==
                        np.arange(D_MODEL)[None, :]).astype(np.float32))               # [128, 32]
    wo_rolled = jnp.stack([jnp.roll(params["wo_t"], d * D_K, axis=0)
                           for d in range(NHEAD)])                                     # [4, 32, 32]
    return dict(wbig=wbig, bbig=bbig, hb128=hb128, rsum=rsum,
                wo_rolled=wo_rolled, bo=params["bo"])


def init_params(rng, d_model):
    """Deterministic init mirroring nn.Linear's U(-1/sqrt(in), 1/sqrt(in)) for W and b.
    Weights stored pre-transposed ([in, out])."""
    bound = 1.0 / math.sqrt(d_model)
    keys = jax.random.split(rng, 8)

    def lin(kw, kb):
        w = jax.random.uniform(kw, (d_model, d_model), jnp.float32, -bound, bound)
        b = jax.random.uniform(kb, (1, d_model), jnp.float32, -bound, bound)
        return w.T, b

    wq_t, bq = lin(keys[0], keys[1])
    wk_t, bk = lin(keys[2], keys[3])
    wv_t, bv = lin(keys[4], keys[5])
    wo_t, bo = lin(keys[6], keys[7])
    return dict(wq_t=wq_t, bq=bq, wk_t=wk_t, bk=bk,
                wv_t=wv_t, bv=bv, wo_t=wo_t, bo=bo)


def reference(query, key, value, params):
    """Pure-JAX mirror of the PyTorch forward (mask=None, eval mode)."""
    B, S, D = query.shape
    q = (query @ params["wq_t"] + params["bq"]).reshape(B, S, NHEAD, D_K)
    k = (key @ params["wk_t"] + params["bk"]).reshape(B, S, NHEAD, D_K)
    v = (value @ params["wv_t"] + params["bv"]).reshape(B, S, NHEAD, D_K)
    scores = jnp.einsum("bshd,bstd->bsht", q, k) / math.sqrt(D_K)
    x = jnp.einsum("bsht,bstd->bshd", scores, v)
    x = jnp.transpose(x, (0, 2, 1, 3)).reshape(B, -1, NHEAD * D_K)
    return x @ params["wo_t"] + params["bo"]


if __name__ == "__main__":
    root = jax.random.PRNGKey(0)
    kq, kk, kv, kp = jax.random.split(root, 4)
    B, S = 2, 8
    query = jax.random.normal(kq, (B, S, D_MODEL), jnp.float32)
    key_in = jax.random.normal(kk, (B, S, D_MODEL), jnp.float32)
    value = jax.random.normal(kv, (B, S, D_MODEL), jnp.float32)
    params = init_params(kp, D_MODEL)
    kparams = prepare_params(params)

    out = multi_head_attention(query, key_in, value, kparams)
    out = jax.block_until_ready(out)

    ref = reference(query, key_in, value, params)
    assert out.shape == (B, S, D_MODEL), out.shape
    err = float(jnp.max(jnp.abs(out - ref)))
    assert jnp.allclose(out, ref, atol=1e-4, rtol=1e-4), err
    print("KERNEL_OK")
</pallas_src>

<mosaic_0001>
module attributes {stable_mosaic.version = 11 : i64} {
  func.func @_mha_fused_kernel(%arg0: i32, %arg1: memref<8x96xf32, #tpu.memory_space<vmem>>, %arg2: memref<96x384xf32, #tpu.memory_space<vmem>>, %arg3: memref<1x384xf32, #tpu.memory_space<vmem>>, %arg4: memref<128x128xf32, #tpu.memory_space<vmem>>, %arg5: memref<128x32xf32, #tpu.memory_space<vmem>>, %arg6: memref<4x32x32xf32, #tpu.memory_space<vmem>>, %arg7: memref<4x8x32xf32, #tpu.memory_space<vmem>>, %arg8: memref<4x8x8xf32, #tpu.memory_space<vmem>>, %arg9: memref<1x32xf32, #tpu.memory_space<vmem>>, %arg10: memref<8x32xf32, #tpu.memory_space<vmem>>) attributes {dimension_semantics = [#tpu.dimension_semantics<parallel>], iteration_bounds = array<i64: 2>, scalar_prefetch = 0 : i64, scratch_operands = 0 : i64, tpu.core_type = #tpu.core_type<tc>, window_params = [{transform_indices = @transform_0, window_bounds = array<i64: 8, 96>}, {pipeline_mode = #tpu.pipeline_mode<synchronous>, transform_indices = @transform_1, window_bounds = array<i64: 96, 384>}, {pipeline_mode = #tpu.pipeline_mode<synchronous>, transform_indices = @transform_2, window_bounds = array<i64: 1, 384>}, {pipeline_mode = #tpu.pipeline_mode<synchronous>, transform_indices = @transform_3, window_bounds = array<i64: 128, 128>}, {pipeline_mode = #tpu.pipeline_mode<synchronous>, transform_indices = @transform_4, window_bounds = array<i64: 128, 32>}, {pipeline_mode = #tpu.pipeline_mode<synchronous>, transform_indices = @transform_5, window_bounds = array<i64: 4, 32, 32>}, {pipeline_mode = #tpu.pipeline_mode<synchronous>, transform_indices = @transform_6, window_bounds = array<i64: 4, 8, 32>}, {pipeline_mode = #tpu.pipeline_mode<synchronous>, transform_indices = @transform_7, window_bounds = array<i64: 4, 8, 8>}, {pipeline_mode = #tpu.pipeline_mode<synchronous>, transform_indices = @transform_8, window_bounds = array<i64: 1, 32>}, {transform_indices = @transform_9, window_bounds = array<i64: 8, 32>}]} {
    %c0 = arith.constant 0 : index
    %c0_0 = arith.constant 0 : index
    %0 = vector.load %arg1[%c0, %c0_0] : memref<8x96xf32, #tpu.memory_space<vmem>>, vector<8x96xf32>
    %c0_1 = arith.constant 0 : index
    %c0_2 = arith.constant 0 : index
    %1 = vector.load %arg2[%c0_1, %c0_2] : memref<96x384xf32, #tpu.memory_space<vmem>>, vector<96x384xf32>
    %cst = arith.constant dense<0.000000e+00> : vector<8x384xf32>
    %2 = tpu.matmul %0, %1, %cst {dimension_numbers = #tpu.dot_dimension_numbers<[1], [0], [0], [1], [0, 0, 1, 1], [], []>} : vector<8x96xf32>, vector<96x384xf32>, vector<8x384xf32> -> vector<8x384xf32>
    %c0_3 = arith.constant 0 : index
    %c0_4 = arith.constant 0 : index
    %3 = vector.load %arg3[%c0_3, %c0_4] : memref<1x384xf32, #tpu.memory_space<vmem>>, vector<1x384xf32>
    %4 = vector.broadcast %3 : vector<1x384xf32> to vector<8x384xf32>
    %5 = arith.addf %2, %4 : vector<8x384xf32>
    %6 = vector.extract_strided_slice %5 {offsets = [0, 0], sizes = [8, 128], strides = [1, 1]} : vector<8x384xf32> to vector<8x128xf32>
    %7 = vector.extract_strided_slice %5 {offsets = [0, 128], sizes = [8, 128], strides = [1, 1]} : vector<8x384xf32> to vector<8x128xf32>
    %8 = vector.extract_strided_slice %5 {offsets = [0, 256], sizes = [8, 128], strides = [1, 1]} : vector<8x384xf32> to vector<8x128xf32>
    %9 = arith.mulf %6, %7 : vector<8x128xf32>
    %c0_5 = arith.constant 0 : index
    %c0_6 = arith.constant 0 : index
    %10 = vector.load %arg4[%c0_5, %c0_6] : memref<128x128xf32, #tpu.memory_space<vmem>>, vector<128x128xf32>
    %cst_7 = arith.constant dense<0.000000e+00> : vector<8x128xf32>
    %11 = tpu.matmul %9, %10, %cst_7 {dimension_numbers = #tpu.dot_dimension_numbers<[1], [0], [0], [1], [0, 0, 1, 1], [], []>} : vector<8x128xf32>, vector<128x128xf32>, vector<8x128xf32> -> vector<8x128xf32>
    %12 = arith.mulf %11, %8 : vector<8x128xf32>
    %c0_8 = arith.constant 0 : index
    %c0_9 = arith.constant 0 : index
    %13 = vector.load %arg5[%c0_8, %c0_9] : memref<128x32xf32, #tpu.memory_space<vmem>>, vector<128x32xf32>
    %cst_10 = arith.constant dense<0.000000e+00> : vector<8x32xf32>
    %14 = tpu.matmul %12, %13, %cst_10 {dimension_numbers = #tpu.dot_dimension_numbers<[1], [0], [0], [1], [0, 0, 1, 1], [], []>} : vector<8x128xf32>, vector<128x32xf32>, vector<8x32xf32> -> vector<8x32xf32>
    %c0_11 = arith.constant 0 : index
    %c0_12 = arith.constant 0 : index
    %c0_13 = arith.constant 0 : index
    %15 = vector.load %arg7[%c0_11, %c0_12, %c0_13] : memref<4x8x32xf32, #tpu.memory_space<vmem>>, vector<1x8x32xf32>
    %16 = vector.shape_cast %15 : vector<1x8x32xf32> to vector<8x32xf32>
    %17 = arith.mulf %14, %16 : vector<8x32xf32>
    %c0_14 = arith.constant 0 : index
    %c0_15 = arith.constant 0 : index
    %c0_16 = arith.constant 0 : index
    %18 = vector.load %arg6[%c0_14, %c0_15, %c0_16] : memref<4x32x32xf32, #tpu.memory_space<vmem>>, vector<1x32x32xf32>
    %19 = vector.shape_cast %18 : vector<1x32x32xf32> to vector<32x32xf32>
    %cst_17 = arith.constant dense<0.000000e+00> : vector<8x32xf32>
    %20 = tpu.matmul %17, %19, %cst_17 {dimension_numbers = #tpu.dot_dimension_numbers<[1], [0], [0], [1], [0, 0, 1, 1], [], []>} : vector<8x32xf32>, vector<32x32xf32>, vector<8x32xf32> -> vector<8x32xf32>
    %c0_18 = arith.constant 0 : index
    %c0_19 = arith.constant 0 : index
    %c0_20 = arith.constant 0 : index
    %21 = vector.load %arg8[%c0_18, %c0_19, %c0_20] : memref<4x8x8xf32, #tpu.memory_space<vmem>>, vector<1x8x8xf32>
    %22 = vector.shape_cast %21 : vector<1x8x8xf32> to vector<8x8xf32>
    %cst_21 = arith.constant dense<0.000000e+00> : vector<8x32xf32>
    %23 = tpu.matmul %22, %20, %cst_21 {dimension_numbers = #tpu.dot_dimension_numbers<[1], [0], [0], [1], [0, 0, 1, 1], [], []>} : vector<8x8xf32>, vector<8x32xf32>, vector<8x32xf32> -> vector<8x32xf32>
    %c1 = arith.constant 1 : index
    %c0_22 = arith.constant 0 : index
    %c0_23 = arith.constant 0 : index
    %24 = vector.load %arg7[%c1, %c0_22, %c0_23] : memref<4x8x32xf32, #tpu.memory_space<vmem>>, vector<1x8x32xf32>
    %25 = vector.shape_cast %24 : vector<1x8x32xf32> to vector<8x32xf32>
    %26 = arith.mulf %14, %25 : vector<8x32xf32>
    %c1_24 = arith.constant 1 : index
    %c0_25 = arith.constant 0 : index
    %c0_26 = arith.constant 0 : index
    %27 = vector.load %arg6[%c1_24, %c0_25, %c0_26] : memref<4x32x32xf32, #tpu.memory_space<vmem>>, vector<1x32x32xf32>
    %28 = vector.shape_cast %27 : vector<1x32x32xf32> to vector<32x32xf32>
    %cst_27 = arith.constant dense<0.000000e+00> : vector<8x32xf32>
    %29 = tpu.matmul %26, %28, %cst_27 {dimension_numbers = #tpu.dot_dimension_numbers<[1], [0], [0], [1], [0, 0, 1, 1], [], []>} : vector<8x32xf32>, vector<32x32xf32>, vector<8x32xf32> -> vector<8x32xf32>
    %c1_28 = arith.constant 1 : index
    %c0_29 = arith.constant 0 : index
    %c0_30 = arith.constant 0 : index
    %30 = vector.load %arg8[%c1_28, %c0_29, %c0_30] : memref<4x8x8xf32, #tpu.memory_space<vmem>>, vector<1x8x8xf32>
    %31 = vector.shape_cast %30 : vector<1x8x8xf32> to vector<8x8xf32>
    %cst_31 = arith.constant dense<0.000000e+00> : vector<8x32xf32>
    %32 = tpu.matmul %31, %29, %cst_31 {dimension_numbers = #tpu.dot_dimension_numbers<[1], [0], [0], [1], [0, 0, 1, 1], [], []>} : vector<8x8xf32>, vector<8x32xf32>, vector<8x32xf32> -> vector<8x32xf32>
    %33 = arith.addf %23, %32 : vector<8x32xf32>
    %c2 = arith.constant 2 : index
    %c0_32 = arith.constant 0 : index
    %c0_33 = arith.constant 0 : index
    %34 = vector.load %arg7[%c2, %c0_32, %c0_33] : memref<4x8x32xf32, #tpu.memory_space<vmem>>, vector<1x8x32xf32>
    %35 = vector.shape_cast %34 : vector<1x8x32xf32> to vector<8x32xf32>
    %36 = arith.mulf %14, %35 : vector<8x32xf32>
    %c2_34 = arith.constant 2 : index
    %c0_35 = arith.constant 0 : index
    %c0_36 = arith.constant 0 : index
    %37 = vector.load %arg6[%c2_34, %c0_35, %c0_36] : memref<4x32x32xf32, #tpu.memory_space<vmem>>, vector<1x32x32xf32>
    %38 = vector.shape_cast %37 : vector<1x32x32xf32> to vector<32x32xf32>
    %cst_37 = arith.constant dense<0.000000e+00> : vector<8x32xf32>
    %39 = tpu.matmul %36, %38, %cst_37 {dimension_numbers = #tpu.dot_dimension_numbers<[1], [0], [0], [1], [0, 0, 1, 1], [], []>} : vector<8x32xf32>, vector<32x32xf32>, vector<8x32xf32> -> vector<8x32xf32>
    %c2_38 = arith.constant 2 : index
    %c0_39 = arith.constant 0 : index
    %c0_40 = arith.constant 0 : index
    %40 = vector.load %arg8[%c2_38, %c0_39, %c0_40] : memref<4x8x8xf32, #tpu.memory_space<vmem>>, vector<1x8x8xf32>
    %41 = vector.shape_cast %40 : vector<1x8x8xf32> to vector<8x8xf32>
    %cst_41 = arith.constant dense<0.000000e+00> : vector<8x32xf32>
    %42 = tpu.matmul %41, %39, %cst_41 {dimension_numbers = #tpu.dot_dimension_numbers<[1], [0], [0], [1], [0, 0, 1, 1], [], []>} : vector<8x8xf32>, vector<8x32xf32>, vector<8x32xf32> -> vector<8x32xf32>
    %43 = arith.addf %33, %42 : vector<8x32xf32>
    %c3 = arith.constant 3 : index
    %c0_42 = arith.constant 0 : index
    %c0_43 = arith.constant 0 : index
    %44 = vector.load %arg7[%c3, %c0_42, %c0_43] : memref<4x8x32xf32, #tpu.memory_space<vmem>>, vector<1x8x32xf32>
    %45 = vector.shape_cast %44 : vector<1x8x32xf32> to vector<8x32xf32>
    %46 = arith.mulf %14, %45 : vector<8x32xf32>
    %c3_44 = arith.constant 3 : index
    %c0_45 = arith.constant 0 : index
    %c0_46 = arith.constant 0 : index
    %47 = vector.load %arg6[%c3_44, %c0_45, %c0_46] : memref<4x32x32xf32, #tpu.memory_space<vmem>>, vector<1x32x32xf32>
    %48 = vector.shape_cast %47 : vector<1x32x32xf32> to vector<32x32xf32>
    %cst_47 = arith.constant dense<0.000000e+00> : vector<8x32xf32>
    %49 = tpu.matmul %46, %48, %cst_47 {dimension_numbers = #tpu.dot_dimension_numbers<[1], [0], [0], [1], [0, 0, 1, 1], [], []>} : vector<8x32xf32>, vector<32x32xf32>, vector<8x32xf32> -> vector<8x32xf32>
    %c3_48 = arith.constant 3 : index
    %c0_49 = arith.constant 0 : index
    %c0_50 = arith.constant 0 : index
    %50 = vector.load %arg8[%c3_48, %c0_49, %c0_50] : memref<4x8x8xf32, #tpu.memory_space<vmem>>, vector<1x8x8xf32>
    %51 = vector.shape_cast %50 : vector<1x8x8xf32> to vector<8x8xf32>
    %cst_51 = arith.constant dense<0.000000e+00> : vector<8x32xf32>
    %52 = tpu.matmul %51, %49, %cst_51 {dimension_numbers = #tpu.dot_dimension_numbers<[1], [0], [0], [1], [0, 0, 1, 1], [], []>} : vector<8x8xf32>, vector<8x32xf32>, vector<8x32xf32> -> vector<8x32xf32>
    %53 = arith.addf %43, %52 : vector<8x32xf32>
    %c0_52 = arith.constant 0 : index
    %c0_53 = arith.constant 0 : index
    %54 = vector.load %arg9[%c0_52, %c0_53] : memref<1x32xf32, #tpu.memory_space<vmem>>, vector<1x32xf32>
    %55 = vector.broadcast %54 : vector<1x32xf32> to vector<8x32xf32>
    %56 = arith.addf %53, %55 : vector<8x32xf32>
    %c0_54 = arith.constant 0 : index
    %c0_55 = arith.constant 0 : index
    %57 = vector.load %arg10[%c0_54, %c0_55] : memref<8x32xf32, #tpu.memory_space<vmem>>, vector<8x32xf32>
    tpu.vector_store %arg10[%c0_54, %c0_55], %56 {strides = array<i32>} : memref<8x32xf32, #tpu.memory_space<vmem>>, vector<8x32xf32>,
    return
  }
  func.func @transform_0(%arg0: i32) -> (i32, i32) {
    %c0_i32 = arith.constant 0 : i32
    %c0_i32_0 = arith.constant 0 : i32
    return %arg0, %c0_i32 : i32, i32
  }
  func.func @transform_1(%arg0: i32) -> (i32, i32) {
    %c0_i32 = arith.constant 0 : i32
    %c0_i32_0 = arith.constant 0 : i32
    %c0_i32_1 = arith.constant 0 : i32
    return %c0_i32, %c0_i32_0 : i32, i32
  }
  func.func @transform_2(%arg0: i32) -> (i32, i32) {
    %c0_i32 = arith.constant 0 : i32
    %c0_i32_0 = arith.constant 0 : i32
    %c0_i32_1 = arith.constant 0 : i32
    return %c0_i32, %c0_i32_0 : i32, i32
  }
  func.func @transform_3(%arg0: i32) -> (i32, i32) {
    %c0_i32 = arith.constant 0 : i32
    %c0_i32_0 = arith.constant 0 : i32
    %c0_i32_1 = arith.constant 0 : i32
    return %c0_i32, %c0_i32_0 : i32, i32
  }
  func.func @transform_4(%arg0: i32) -> (i32, i32) {
    %c0_i32 = arith.constant 0 : i32
    %c0_i32_0 = arith.constant 0 : i32
    %c0_i32_1 = arith.constant 0 : i32
    return %c0_i32, %c0_i32_0 : i32, i32
  }
  func.func @transform_5(%arg0: i32) -> (i32, i32, i32) {
    %c0_i32 = arith.constant 0 : i32
    %c0_i32_0 = arith.constant 0 : i32
    %c0_i32_1 = arith.constant 0 : i32
    %c0_i32_2 = arith.constant 0 : i32
    return %c0_i32, %c0_i32_0, %c0_i32_1 : i32, i32, i32
  }
  func.func @transform_6(%arg0: i32) -> (i32, i32, i32) {
    %c0_i32 = arith.constant 0 : i32
    %c0_i32_0 = arith.constant 0 : i32
    %c0_i32_1 = arith.constant 0 : i32
    %c0_i32_2 = arith.constant 0 : i32
    return %c0_i32, %c0_i32_0, %c0_i32_1 : i32, i32, i32
  }
  func.func @transform_7(%arg0: i32) -> (i32, i32, i32) {
    %c0_i32 = arith.constant 0 : i32
    %c0_i32_0 = arith.constant 0 : i32
    %c0_i32_1 = arith.constant 0 : i32
    %c0_i32_2 = arith.constant 0 : i32
    return %c0_i32, %c0_i32_0, %c0_i32_1 : i32, i32, i32
  }
  func.func @transform_8(%arg0: i32) -> (i32, i32) {
    %c0_i32 = arith.constant 0 : i32
    %c0_i32_0 = arith.constant 0 : i32
    %c0_i32_1 = arith.constant 0 : i32
    return %c0_i32, %c0_i32_0 : i32, i32
  }
  func.func @transform_9(%arg0: i32) -> (i32, i32) {
    %c0_i32 = arith.constant 0 : i32
    %c0_i32_0 = arith.constant 0 : i32
    return %arg0, %c0_i32 : i32, i32
  }
}

</mosaic_0001>

<llo_original>
// kernel: tpu_custom_call.1
$region0: #{tpu_custom_call.1}
  #allocation0 [shape = 'u32[]', space=smem, size = 0x4, offset = 0x4, fixed_abs, tag = 'smem constant byte address 0x4 - core index']
  #allocation1 [shape = 'u32[144,128]{1,0:T(1,128)}', space=vmem, size = 0x12000, scoped, tag = 'internal scratch']
  %s0 = inlined_call_operand.hbm [shape: f32[16,96], index: 0, kind: input, shape index: {}]
  %s1 = inlined_call_operand.hbm [shape: f32[96,384], index: 1, kind: input, shape index: {}]
  %s2 = inlined_call_operand.vmem [shape: f32[1,384], index: 2, kind: input, shape index: {}]
  %s3 = inlined_call_operand.vmem [shape: f32[128,128], index: 3, kind: input, shape index: {}]
  %s4 = inlined_call_operand.vmem [shape: f32[128,32], index: 4, kind: input, shape index: {}]
  %s5 = inlined_call_operand.hbm [shape: f32[4,32,32], index: 5, kind: input, shape index: {}]
  %s6 = inlined_call_operand.vmem [shape: f32[4,8,32], index: 6, kind: input, shape index: {}]
  %s7 = inlined_call_operand.hbm [shape: f32[4,8,8], index: 7, kind: input, shape index: {}]
  %s8 = inlined_call_operand.vmem [shape: f32[1,32], index: 8, kind: input, shape index: {}]
  %s9 = inlined_call_operand.hbm [shape: f32[16,32], index: 9, kind: output, shape index: {}]
  %s10 = sld [smem:[#allocation0]]
  $region85: #{tpu_custom_call.1} parent=0
    _
  %s12 = ssub.s32 1, %s10
  %s13 = scalar_select 0, %s12, %s10
  $region1: #{tpu_custom_call.1} parent=0
    #allocation2 [shape = 'u8[8192]{0}', space=vmem, size = 0x2000, scoped, tag = 'input window, operand 0']
    #allocation3 [shape = 's32[2]{0}', space=sflag, size = 0x8, scoped, tag = 'scoped memory for tpu_custom_call.1']
    #allocation4 [shape = 's32[2]{0}', space=sflag, size = 0x8, scoped, tag = 'scoped memory for tpu_custom_call.1']
    #allocation5 [shape = 'u8[147456]{0}', space=vmem, size = 0x24000, scoped, tag = 'input window, operand 1, single buffered']
    #allocation6 [shape = 's32[1]{0}', space=sflag, size = 0x4, scoped, tag = 'scoped memory for tpu_custom_call.1']
    #allocation7 [shape = 'u8[65536]{0}', space=vmem, size = 0x10000, scoped, tag = 'input window, operand 5, single buffered']
    #allocation8 [shape = 'u8[16384]{0}', space=vmem, size = 0x4000, scoped, tag = 'input window, operand 7, single buffered']
    #allocation9 [shape = 's32[1]{0}', space=sflag, size = 0x4, scoped, tag = 'scoped memory for tpu_custom_call.1']
    #allocation10 [shape = 'u8[8192]{0}', space=vmem, size = 0x2000, scoped, tag = 'output window, operand 0']
    %14 = vsyncpa [#allocation3], 0
    %s15 = scalar_lea.sflag [#allocation3], 1
    %16 = vsyncpa %s15, 0
    %17 = vsyncpa [#allocation6], 0
    %18 = vsyncpa [#allocation9], 0
    %19 = vsyncpa [#allocation4], 0
    %s20 = scalar_lea.sflag [#allocation4], 1
    %21 = vsyncpa %s20, 0
    loop: start=0, step=1, limit=4
    $region2: #{tpu_custom_call.1} parent=1 // loop_pre_header
      _
    $region3: #{tpu_custom_call.1} parent=1 // loop_header
      %s23 = sphi 0, %s27
      %p24 = scmp.ge.s32.totalorder %s23, 4
      %s33 = sphi 0, %s35
      %s36 = sphi 0, %s33
      %s37 = sphi 0, %s36
      %s53 = sphi 0, %s37
      %s57 = sphi 0, %s57
      %s59 = sphi 0, %s57
      %s60 = sphi 0, %s59
      %s74 = sphi 0, %s60
      %s78 = sphi 0, %s78
      %s80 = sphi 0, %s78
      %s81 = sphi 0, %s80
      %s95 = sphi 0, %s81
      %s99 = sphi 0, %s99
      %s101 = sphi 0, %s99
      %s102 = sphi 0, %s101
      %s116 = sphi 0, %s102
      %s120 = sphi 0, %s120
      %s122 = sphi 0, %s120
      %s123 = sphi 0, %s122
      %s137 = sphi 0, %s123
      %s141 = sphi 0, %s141
      %s143 = sphi 0, %s141
      %s144 = sphi 0, %s143
      %s158 = sphi 0, %s144
      %s162 = sphi 0, %s162
      %s164 = sphi 0, %s162
      %s165 = sphi 0, %s164
      %s179 = sphi 0, %s165
      %s183 = sphi 0, %s183
      %s185 = sphi 0, %s183
      %s186 = sphi 0, %s185
      %s200 = sphi 0, %s186
      %s204 = sphi 0, %s204
      %s206 = sphi 0, %s204
      %s207 = sphi 0, %s206
      %s221 = sphi 0, %s207
      %s227 = sphi 0, %s229
      %s230 = sphi 0, %s227
      %s231 = sphi 0, %s230
      %s247 = sphi 0, %s231
    $region4: #{tpu_custom_call.1} parent=1 // loop_header_branch
      %26 = sbr.rel (%p24) target = $region8
    $region5: #{tpu_custom_call.1} parent=1 // loop_body
      %s28 = ssub.s32 %s23, 1
      %s29 = ssub.s32 %s23, 2
      %s30 = sadd.s32 %s23, 1
      %s31 = ssub.s32 %s23, %s30
      %p32 = scmp.eq.s32.totalorder %s31, 0
      %s34 = sadd.s32 %s33, 1
      %s35 = scalar_select %p32, %s33, %s34
      %p38 = pneg %p32
      %p39 = scmp.eq.s32.totalorder %s23, 1
      %p40 = por %p38, %p39
      %p41 = scmp.ne.s32.totalorder %s33, %s36
      %p42 = scmp.eq.s32.totalorder %s23, 0
      %p43 = por %p41, %p42
      %p44 = scmp.ne.s32.totalorder %s33, %s36
      %p45 = scmp.eq.s32.totalorder %s28, 1
      %p46 = por %p44, %p45
      %p47 = scmp.ne.s32.totalorder %s36, %s37
      %p48 = scmp.eq.s32.totalorder %s28, 0
      %p49 = por %p47, %p48
      %p50 = scmp.ne.s32.totalorder %s36, %s37
      %p51 = scmp.eq.s32.totalorder %s29, 1
      %p52 = por %p50, %p51
      %p54 = scmp.ne.s32.totalorder %s37, %s53
      %p55 = scmp.eq.s32.totalorder %s29, 0
      %p56 = por %p54, %p55
      %s58 = sadd.s32 %s57, 1
      %p61 = scmp.eq.s32.totalorder %s23, 1
      %p62 = scmp.ne.s32.totalorder %s57, %s59
      %p63 = scmp.eq.s32.totalorder %s23, 0
      %p64 = por %p62, %p63
      %p65 = scmp.ne.s32.totalorder %s57, %s59
      %p66 = scmp.eq.s32.totalorder %s28, 1
      %p67 = por %p65, %p66
      %p68 = scmp.ne.s32.totalorder %s59, %s60
      %p69 = scmp.eq.s32.totalorder %s28, 0
      %p70 = por %p68, %p69
      %p71 = scmp.ne.s32.totalorder %s59, %s60
      %p72 = scmp.eq.s32.totalorder %s29, 1
      %p73 = por %p71, %p72
      %p75 = scmp.ne.s32.totalorder %s60, %s74
      %p76 = scmp.eq.s32.totalorder %s29, 0
      %p77 = por %p75, %p76
      %s79 = sadd.s32 %s78, 1
      %p82 = scmp.eq.s32.totalorder %s23, 1
      %p83 = scmp.ne.s32.totalorder %s78, %s80
      %p84 = scmp.eq.s32.totalorder %s23, 0
      %p85 = por %p83, %p84
      %p86 = scmp.ne.s32.totalorder %s78, %s80
      %p87 = scmp.eq.s32.totalorder %s28, 1
      %p88 = por %p86, %p87
      %p89 = scmp.ne.s32.totalorder %s80, %s81
      %p90 = scmp.eq.s32.totalorder %s28, 0
      %p91 = por %p89, %p90
      %p92 = scmp.ne.s32.totalorder %s80, %s81
      %p93 = scmp.eq.s32.totalorder %s29, 1
      %p94 = por %p92, %p93
      %p96 = scmp.ne.s32.totalorder %s81, %s95
      %p97 = scmp.eq.s32.totalorder %s29, 0
      %p98 = por %p96, %p97
      %s100 = sadd.s32 %s99, 1
      %p103 = scmp.eq.s32.totalorder %s23, 1
      %p104 = scmp.ne.s32.totalorder %s99, %s101
      %p105 = scmp.eq.s32.totalorder %s23, 0
      %p106 = por %p104, %p105
      %p107 = scmp.ne.s32.totalorder %s99, %s101
      %p108 = scmp.eq.s32.totalorder %s28, 1
      %p109 = por %p107, %p108
      %p110 = scmp.ne.s32.totalorder %s101, %s102
      %p111 = scmp.eq.s32.totalorder %s28, 0
      %p112 = por %p110, %p111
      %p113 = scmp.ne.s32.totalorder %s101, %s102
      %p114 = scmp.eq.s32.totalorder %s29, 1
      %p115 = por %p113, %p114
      %p117 = scmp.ne.s32.totalorder %s102, %s116
      %p118 = scmp.eq.s32.totalorder %s29, 0
      %p119 = por %p117, %p118
      %s121 = sadd.s32 %s120, 1
      %p124 = scmp.eq.s32.totalorder %s23, 1
      %p125 = scmp.ne.s32.totalorder %s120, %s122
      %p126 = scmp.eq.s32.totalorder %s23, 0
      %p127 = por %p125, %p126
      %p128 = scmp.ne.s32.totalorder %s120, %s122
      %p129 = scmp.eq.s32.totalorder %s28, 1
      %p130 = por %p128, %p129
      %p131 = scmp.ne.s32.totalorder %s122, %s123
      %p132 = scmp.eq.s32.totalorder %s28, 0
      %p133 = por %p131, %p132
      %p134 = scmp.ne.s32.totalorder %s122, %s123
      %p135 = scmp.eq.s32.totalorder %s29, 1
      %p136 = por %p134, %p135
      %p138 = scmp.ne.s32.totalorder %s123, %s137
      %p139 = scmp.eq.s32.totalorder %s29, 0
      %p140 = por %p138, %p139
      %s142 = sadd.s32 %s141, 1
      %p145 = scmp.eq.s32.totalorder %s23, 1
      %p146 = scmp.ne.s32.totalorder %s141, %s143
      %p147 = scmp.eq.s32.totalorder %s23, 0
      %p148 = por %p146, %p147
      %p149 = scmp.ne.s32.totalorder %s141, %s143
      %p150 = scmp.eq.s32.totalorder %s28, 1
      %p151 = por %p149, %p150
      %p152 = scmp.ne.s32.totalorder %s143, %s144
      %p153 = scmp.eq.s32.totalorder %s28, 0
      %p154 = por %p152, %p153
      %p155 = scmp.ne.s32.totalorder %s143, %s144
      %p156 = scmp.eq.s32.totalorder %s29, 1
      %p157 = por %p155, %p156
      %p159 = scmp.ne.s32.totalorder %s144, %s158
      %p160 = scmp.eq.s32.totalorder %s29, 0
      %p161 = por %p159, %p160
      %s163 = sadd.s32 %s162, 1
      %p166 = scmp.eq.s32.totalorder %s23, 1
      %p167 = scmp.ne.s32.totalorder %s162, %s164
      %p168 = scmp.eq.s32.totalorder %s23, 0
      %p169 = por %p167, %p168
      %p170 = scmp.ne.s32.totalorder %s162, %s164
      %p171 = scmp.eq.s32.totalorder %s28, 1
      %p172 = por %p170, %p171
      %p173 = scmp.ne.s32.totalorder %s164, %s165
      %p174 = scmp.eq.s32.totalorder %s28, 0
      %p175 = por %p173, %p174
      %p176 = scmp.ne.s32.totalorder %s164, %s165
      %p177 = scmp.eq.s32.totalorder %s29, 1
      %p178 = por %p176, %p177
      %p180 = scmp.ne.s32.totalorder %s165, %s179
      %p181 = scmp.eq.s32.totalorder %s29, 0
      %p182 = por %p180, %p181
      %s184 = sadd.s32 %s183, 1
      %p187 = scmp.eq.s32.totalorder %s23, 1
      %p188 = scmp.ne.s32.totalorder %s183, %s185
      %p189 = scmp.eq.s32.totalorder %s23, 0
      %p190 = por %p188, %p189
      %p191 = scmp.ne.s32.totalorder %s183, %s185
      %p192 = scmp.eq.s32.totalorder %s28, 1
      %p193 = por %p191, %p192
      %p194 = scmp.ne.s32.totalorder %s185, %s186
      %p195 = scmp.eq.s32.totalorder %s28, 0
      %p196 = por %p194, %p195
      %p197 = scmp.ne.s32.totalorder %s185, %s186
      %p198 = scmp.eq.s32.totalorder %s29, 1
      %p199 = por %p197, %p198
      %p201 = scmp.ne.s32.totalorder %s186, %s200
      %p202 = scmp.eq.s32.totalorder %s29, 0
      %p203 = por %p201, %p202
      %s205 = sadd.s32 %s204, 1
      %p208 = scmp.eq.s32.totalorder %s23, 1
      %p209 = scmp.ne.s32.totalorder %s204, %s206
      %p210 = scmp.eq.s32.totalorder %s23, 0
      %p211 = por %p209, %p210
      %p212 = scmp.ne.s32.totalorder %s204, %s206
      %p213 = scmp.eq.s32.totalorder %s28, 1
      %p214 = por %p212, %p213
      %p215 = scmp.ne.s32.totalorder %s206, %s207
      %p216 = scmp.eq.s32.totalorder %s28, 0
      %p217 = por %p215, %p216
      %p218 = scmp.ne.s32.totalorder %s206, %s207
      %p219 = scmp.eq.s32.totalorder %s29, 1
      %p220 = por %p218, %p219
      %p222 = scmp.ne.s32.totalorder %s207, %s221
      %p223 = scmp.eq.s32.totalorder %s29, 0
      %p224 = por %p222, %p223
      %s225 = ssub.s32 %s23, %s30
      %p226 = scmp.eq.s32.totalorder %s225, 0
      %s228 = sadd.s32 %s227, 1
      %s229 = scalar_select %p226, %s227, %s228
      %p232 = pneg %p226
      %p233 = scmp.eq.s32.totalorder %s23, 1
      %p234 = por %p232, %p233
      %p235 = scmp.ne.s32.totalorder %s227, %s230
      %p236 = scmp.eq.s32.totalorder %s23, 0
      %p237 = por %p235, %p236
      %p238 = scmp.ne.s32.totalorder %s227, %s230
      %p239 = scmp.eq.s32.totalorder %s28, 1
      %p240 = por %p238, %p239
      %p241 = scmp.ne.s32.totalorder %s230, %s231
      %p242 = scmp.eq.s32.totalorder %s28, 0
      %p243 = por %p241, %p242
      %p244 = scmp.ne.s32.totalorder %s230, %s231
      %p245 = scmp.eq.s32.totalorder %s29, 1
      %p246 = por %p244, %p245
      %p248 = scmp.ne.s32.totalorder %s231, %s247
      %p249 = scmp.eq.s32.totalorder %s29, 0
      %p250 = por %p248, %p249
      %p251 = scmp.le.s32.totalorder 1, %s23
      %p252 = scmp.lt.s32.totalorder %s23, 3
      %p253 = pnand %p251, %p252
      %p254 = pneg %p253
      // Predicated region
      $region9: #{tpu_custom_call.1} parent=5 // pred_check
        _
      $region10: #{tpu_custom_call.1} parent=5 // pred_check_branch
        %256 = sbr.rel (%p253) target = $region12
      $region11: #{tpu_custom_call.1} parent=5 // pred_region
        %s257 = ssub.s32 %s23, 1
        // Predicated region
        $region13: #{tpu_custom_call.1} parent=11 // pred_check
          %p258 = pneg %p70
        $region14: #{tpu_custom_call.1} parent=11 // pred_check_branch
          %260 = sbr.rel (%p258) target = $region16
        $region15: #{tpu_custom_call.1} parent=11 // pred_region
          %s262 = ssub.s32 4608, 4608
          %263 = vsyncadd [#allocation6], %s262
          %s264 = sshll.u32 [#allocation5], 4
          %s265 = int_to_ptr.vmem [resolvable:$true] %s264
          %270 = dma.hbm_to_vmem [thread:$0]  %s1, 4608, %s265, [#allocation6], 384, 384, 24
        $region16: #{tpu_custom_call.1} parent=11 // pred_fallthru
          _
        // Predicated region
        $region17: #{tpu_custom_call.1} parent=11 // pred_check
          %p271 = pneg %p91
        $region18: #{tpu_custom_call.1} parent=11 // pred_check_branch
          %273 = sbr.rel (%p271) target = $region20
        $region19: #{tpu_custom_call.1} parent=11 // pred_region
          _
        $region20: #{tpu_custom_call.1} parent=11 // pred_fallthru
          _
        // Predicated region
        $region21: #{tpu_custom_call.1} parent=11 // pred_check
          %p274 = pneg %p112
        $region22: #{tpu_custom_call.1} parent=11 // pred_check_branch
          %276 = sbr.rel (%p274) target = $region24
        $region23: #{tpu_custom_call.1} parent=11 // pred_region
          _
        $region24: #{tpu_custom_call.1} parent=11 // pred_fallthru
          _
        // Predicated region
        $region25: #{tpu_custom_call.1} parent=11 // pred_check
          %p277 = pneg %p133
        $region26: #{tpu_custom_call.1} parent=11 // pred_check_branch
          %279 = sbr.rel (%p277) target = $region28
        $region27: #{tpu_custom_call.1} parent=11 // pred_region
          _
        $region28: #{tpu_custom_call.1} parent=11 // pred_fallthru
          _
        // Predicated region
        $region29: #{tpu_custom_call.1} parent=11 // pred_check
          %p280 = pneg %p154
        $region30: #{tpu_custom_call.1} parent=11 // pred_check_branch
          %282 = sbr.rel (%p280) target = $region32
        $region31: #{tpu_custom_call.1} parent=11 // pred_region
          %s284 = ssub.s32 2048, 2048
          %285 = vsyncadd [#allocation6], %s284
          %s286 = sshll.u32 [#allocation7], 4
          %s287 = int_to_ptr.vmem [resolvable:$true] %s286
          %292 = dma.hbm_to_vmem [thread:$0]  %s5, 2048, %s287, [#allocation6], 128, 128, 8
        $region32: #{tpu_custom_call.1} parent=11 // pred_fallthru
          _
        // Predicated region
        $region33: #{tpu_custom_call.1} parent=11 // pred_check
          %p293 = pneg %p175
        $region34: #{tpu_custom_call.1} parent=11 // pred_check_branch
          %295 = sbr.rel (%p293) target = $region36
        $region35: #{tpu_custom_call.1} parent=11 // pred_region
          _
        $region36: #{tpu_custom_call.1} parent=11 // pred_fallthru
          _
        // Predicated region
        $region37: #{tpu_custom_call.1} parent=11 // pred_check
          %p296 = pneg %p196
        $region38: #{tpu_custom_call.1} parent=11 // pred_check_branch
          %298 = sbr.rel (%p296) target = $region40
        $region39: #{tpu_custom_call.1} parent=11 // pred_region
          %s300 = ssub.s32 512, 512
          %301 = vsyncadd [#allocation9], %s300
          %s302 = sshll.u32 [#allocation8], 4
          %s303 = int_to_ptr.vmem [resolvable:$true] %s302
          %308 = dma.hbm_to_vmem [thread:$0]  %s7, 512, %s303, [#allocation9], 128, 128, 8
        $region40: #{tpu_custom_call.1} parent=11 // pred_fallthru
          _
        // Predicated region
        $region41: #{tpu_custom_call.1} parent=11 // pred_check
          %p309 = pneg %p217
        $region42: #{tpu_custom_call.1} parent=11 // pred_check_branch
          %311 = sbr.rel (%p309) target = $region44
        $region43: #{tpu_custom_call.1} parent=11 // pred_region
          _
        $region44: #{tpu_custom_call.1} parent=11 // pred_fallthru
          _
      $region12: #{tpu_custom_call.1} parent=5 // pred_fallthru
        _
      %p312 = scmp.lt.s32.totalorder %s23, 2
      // Predicated region
      $region45: #{tpu_custom_call.1} parent=5 // pred_check
        %p313 = pneg %p312
      $region46: #{tpu_custom_call.1} parent=5 // pred_check_branch
        %315 = sbr.rel (%p313) target = $region48
      $region47: #{tpu_custom_call.1} parent=5 // pred_region
        // Predicated region
        $region49: #{tpu_custom_call.1} parent=47 // pred_check
          %p316 = pneg %p43
        $region50: #{tpu_custom_call.1} parent=47 // pred_check_branch
          %318 = sbr.rel (%p316) target = $region52
        $region51: #{tpu_custom_call.1} parent=47 // pred_region
          %s319 = sand.u32 %s33, 1
          %s320 = scalar_lea.sflag [#allocation3], %s319
          %s321 = sand.u32 %s33, 1
          %s322 = smul.addr %s321, 8
          %s323 = scalar_lea.vmem [#allocation2], %s322
          %s325 = ssub.s32 128, 128
          %326 = vsyncadd %s320, %s325
          %s327 = smul.addr %s23, 128
          %s328 = scalar_lea.hbm %s0, %s327
          %s330 = sshll.u32 %s323, 4
          %s331 = int_to_ptr.vmem [resolvable:$true] %s330
          %333 = dma.hbm_to_vmem [thread:$0]  %s328, 128, %s331, %s320
        $region52: #{tpu_custom_call.1} parent=47 // pred_fallthru
          _
      $region48: #{tpu_custom_call.1} parent=5 // pred_fallthru
        _
      %p334 = scmp.le.s32.totalorder 1, %s23
      %p335 = scmp.lt.s32.totalorder %s23, 3
      %p336 = pnand %p334, %p335
      %p337 = pneg %p336
      // Predicated region
      $region53: #{tpu_custom_call.1} parent=5 // pred_check
        _
      $region54: #{tpu_custom_call.1} parent=5 // pred_check_branch
        %339 = sbr.rel (%p336) target = $region56
      $region55: #{tpu_custom_call.1} parent=5 // pred_region
        %s340 = ssub.s32 %s23, 1
        %s341 = sand.u32 %s36, 1
        %s342 = scalar_lea.sflag [#allocation3], %s341
        %s343 = sand.u32 %s36, 1
        %s344 = smul.addr %s343, 8
        %s345 = scalar_lea.vmem [#allocation2], %s344
        // Predicated region
        $region57: #{tpu_custom_call.1} parent=55 // pred_check
          %p346 = pneg %p49
        $region58: #{tpu_custom_call.1} parent=55 // pred_check_branch
          %348 = sbr.rel (%p346) target = $region60
        $region59: #{tpu_custom_call.1} parent=55 // pred_region
          %349 = dma.done %s342, 128
        $region60: #{tpu_custom_call.1} parent=55 // pred_fallthru
          _
        // Predicated region
        $region61: #{tpu_custom_call.1} parent=55 // pred_check
          %p350 = pneg %p70
        $region62: #{tpu_custom_call.1} parent=55 // pred_check_branch
          %352 = sbr.rel (%p350) target = $region64
        $region63: #{tpu_custom_call.1} parent=55 // pred_region
          %353 = dma.done [#allocation6], 4608
        $region64: #{tpu_custom_call.1} parent=55 // pred_fallthru
          _
        // Predicated region
        $region65: #{tpu_custom_call.1} parent=55 // pred_check
          %p354 = pneg %p154
        $region66: #{tpu_custom_call.1} parent=55 // pred_check_branch
          %356 = sbr.rel (%p354) target = $region68
        $region67: #{tpu_custom_call.1} parent=55 // pred_region
          %357 = dma.done [#allocation6], 2048
        $region68: #{tpu_custom_call.1} parent=55 // pred_fallthru
          _
        // Predicated region
        $region69: #{tpu_custom_call.1} parent=55 // pred_check
          %p358 = pneg %p196
        $region70: #{tpu_custom_call.1} parent=55 // pred_check_branch
          %360 = sbr.rel (%p358) target = $region72
        $region71: #{tpu_custom_call.1} parent=55 // pred_region
          %361 = dma.done [#allocation9], 512
        $region72: #{tpu_custom_call.1} parent=55 // pred_fallthru
          _
        %s362 = sand.u32 %s36, 1
        %s363 = scalar_lea.sflag [#allocation3], %s362
        %s364 = sand.u32 %s36, 1
        %s365 = smul.addr %s364, 8
        %s366 = scalar_lea.vmem [#allocation2], %s365
        %p367 = pneg %p49
        %p368 = pneg %p46
        %p369 = pneg %p70
        %p370 = pneg %p67
        %p371 = pneg %p91
        %p372 = pneg %p88
        %p373 = pneg %p112
        %p374 = pneg %p109
        %p375 = pneg %p133
        %p376 = pneg %p130
        %p377 = pneg %p154
        %p378 = pneg %p151
        %p379 = pneg %p175
        %p380 = pneg %p172
        %p381 = pneg %p196
        %p382 = pneg %p193
        %p383 = pneg %p217
        %p384 = pneg %p214
        %p385 = pneg %p243
        %p386 = pneg %p240
        %s387 = sand.u32 %s230, 1
        %s388 = scalar_lea.sflag [#allocation4], %s387
        %s389 = sand.u32 %s230, 1
        %s390 = smul.addr %s389, 8
        %s391 = scalar_lea.vmem [#allocation10], %s390
        %v392 = vld [vmem:[%s345] sm:$0xff]
        %v393 = vld [vmem:[#allocation5] sm:$0xff]
        %v394 = vld [vmem:[#allocation5 + $0x8] sm:$0xff]
        %v395 = vld [vmem:[#allocation5 + $0x10] sm:$0xff]
        %v396 = vld [vmem:[#allocation5 + $0x18] sm:$0xff]
        %v397 = vld [vmem:[#allocation5 + $0x20] sm:$0xff]
        %v398 = vld [vmem:[#allocation5 + $0x28] sm:$0xff]
        %v399 = vld [vmem:[#allocation5 + $0x30] sm:$0xff]
        %v400 = vld [vmem:[#allocation5 + $0x38] sm:$0xff]
        %v401 = vld [vmem:[#allocation5 + $0x40] sm:$0xff]
        %v402 = vld [vmem:[#allocation5 + $0x48] sm:$0xff]
        %v403 = vld [vmem:[#allocation5 + $0x50] sm:$0xff]
        %v404 = vld [vmem:[#allocation5 + $0x58] sm:$0xff]
        %v405 = vld [vmem:[#allocation5 + $0x60] sm:$0xff]
        %v406 = vld [vmem:[#allocation5 + $0x68] sm:$0xff]
        %v407 = vld [vmem:[#allocation5 + $0x70] sm:$0xff]
        %v408 = vld [vmem:[#allocation5 + $0x78] sm:$0xff]
        %v409 = vld [vmem:[#allocation5 + $0x80] sm:$0xff]
        %v410 = vld [vmem:[#allocation5 + $0x88] sm:$0xff]
        %v411 = vld [vmem:[#allocation5 + $0x90] sm:$0xff]
        %v412 = vld [vmem:[#allocation5 + $0x98] sm:$0xff]
        %v413 = vld [vmem:[#allocation5 + $0xa0] sm:$0xff]
        %v414 = vld [vmem:[#allocation5 + $0xa8] sm:$0xff]
        %v415 = vld [vmem:[#allocation5 + $0xb0] sm:$0xff]
        %v416 = vld [vmem:[#allocation5 + $0xb8] sm:$0xff]
        %v417 = vld [vmem:[#allocation5 + $0xc0] sm:$0xff]
        %v418 = vld [vmem:[#allocation5 + $0xc8] sm:$0xff]
        %v419 = vld [vmem:[#allocation5 + $0xd0] sm:$0xff]
        %v420 = vld [vmem:[#allocation5 + $0xd8] sm:$0xff]
        %v421 = vld [vmem:[#allocation5 + $0xe0] sm:$0xff]
        %v422 = vld [vmem:[#allocation5 + $0xe8] sm:$0xff]
        %v423 = vld [vmem:[#allocation5 + $0xf0] sm:$0xff]
        %v424 = vld [vmem:[#allocation5 + $0xf8] sm:$0xff]
        %v425 = vld [vmem:[#allocation5 + $0x100] sm:$0xff]
        %v426 = vld [vmem:[#allocation5 + $0x108] sm:$0xff]
        %v427 = vld [vmem:[#allocation5 + $0x110] sm:$0xff]
        %v428 = vld [vmem:[#allocation5 + $0x118] sm:$0xff]
        %v429 = vld [vmem:[%s2] sm:$0x7]
        %v431 = vlaneseq
        %v432 = vshrl.u32 %v431, 7
        %v433 = vsub.s32 0, %v432
        %v434 = vrot.slane %v429, %v433
        %v435 = vlaneseq
        %v436 = vshrl.u32 %v435, 7
        %v437 = vsub.s32 1, %v436
        %v438 = vrot.slane %v429, %v437
        %v439 = vlaneseq
        %v440 = vshrl.u32 %v439, 7
        %v441 = vsub.s32 2, %v440
        %v442 = vrot.slane %v429, %v441
        %vm446 = vcmask 785408
        %v448 = vsel %vm446, %v392, 0
        %450 = vmatprep.subr.mxu0 %v394
        %451 = vmatpush1.msra.mxu0 %v393
        %452 = vmatprep.subr.mxu0 %v397
        %453 = vmatpush1.msra.mxu0 %v396
        %454 = vmatprep.subr.mxu0 %v400
        %455 = vmatpush1.msra.mxu0 %v399
        %456 = vmatprep.subr.mxu0 %v403
        %457 = vmatpush1.msra.mxu0 %v402
        %458 = vmatprep.subr.mxu0 %v406
        %459 = vmatpush1.msra.mxu0 %v405
        %460 = vmatprep.subr.mxu0 %v409
        %461 = vmatpush1.msra.mxu0 %v408
        %462 = vmatprep.subr.mxu0 %v412
        %463 = vmatpush1.msra.mxu0 %v411
        %464 = vmatprep.subr.mxu0 %v415
        %465 = vmatpush1.msra.mxu0 %v414
        %466 = vmatprep.subr.mxu0 %v418
        %467 = vmatpush1.msra.mxu0 %v417
        %468 = vmatprep.subr.mxu0 %v421
        %469 = vmatpush1.msra.mxu0 %v420
        %470 = vmatprep.subr.mxu0 %v424
        %471 = vmatpush1.msra.mxu0 %v423
        %472 = vmatprep.subr.mxu0 %v427
        %473 = vmatpush1.msra.mxu0 %v426
        %474 = vmatprep.subr.mxu0 0.0
        %475 = vmatpush1.msra.mxu0 0.0
        %476 = vmatprep.subr.mxu0 0.0
        %477 = vmatpush1.msra.mxu0 0.0
        %478 = vmatprep.subr.mxu0 0.0
        %479 = vmatpush1.msra.mxu0 0.0
        %480 = vmatprep.subr.mxu0 0.0
        %481 = vmatpush1.msra.mxu0 0.0
        %482 = vmatprep.subr.mxu0 0.0
        %483 = vmatpush1.msra.mxu0 0.0
        %484 = vmatprep.subr.mxu0 0.0
        %485 = vmatpush1.msra.mxu0 0.0
        %486 = vmatprep.subr.mxu0 0.0
        %487 = vmatpush1.msra.mxu0 0.0
        %488 = vmatprep.subr.mxu0 0.0
        %489 = vmatpush1.msra.mxu0 0.0
        %490 = vmatprep.subr.mxu0 0.0
        %491 = vmatpush1.msra.mxu0 0.0
        %492 = vmatprep.subr.mxu0 0.0
        %493 = vmatpush1.msra.mxu0 0.0
        %494 = vmatprep.subr.mxu0 0.0
        %495 = vmatpush1.msra.mxu0 0.0
        %496 = vmatprep.subr.mxu0 0.0
        %497 = vmatpush1.msra.mxu0 0.0
        %498 = vmatprep.subr.mxu0 0.0
        %499 = vmatpush1.msra.mxu0 0.0
        %500 = vmatprep.subr.mxu0 0.0
        %501 = vmatpush1.msra.mxu0 0.0
        %502 = vmatprep.subr.mxu0 0.0
        %503 = vmatpush1.msra.mxu0 0.0
        %504 = vmatprep.subr.mxu0 0.0
        %505 = vmatpush1.msra.mxu0 0.0
        %506 = vmatprep.subr.mxu0 0.0
        %507 = vmatpush1.msra.mxu0 0.0
        %508 = vmatprep.subr.mxu0 0.0
        %509 = vmatpush1.msra.mxu0 0.0
        %510 = vmatprep.subr.mxu0 0.0
        %511 = vmatpush1.msra.mxu0 0.0
        %512 = vmatprep.subr.mxu0 0.0
        %513 = vmatpush1.msra.mxu0 0.0
        %514 = vmatprep.mubr.f32.mxu0 0.0
        %515 = vmatmul.mubr.f32.gmra.mrb[0].mxu0 %v448
        %v516 = vpop.f32.mrb[0].mxu0
        %v517 = vadd.f32 %v434, %v516
        %v518 = vpop.f32.mrb[0].mxu0
        %v519 = vadd.f32 %v438, %v518
        %520 = vdwg.mxu0
        %521 = vmatprep.subr.mxu0 0.0
        %522 = vmatpush1.msra.mxu0 %v395
        %523 = vmatprep.subr.mxu0 0.0
        %524 = vmatpush1.msra.mxu0 %v398
        %525 = vmatprep.subr.mxu0 0.0
        %526 = vmatpush1.msra.mxu0 %v401
        %527 = vmatprep.subr.mxu0 0.0
        %528 = vmatpush1.msra.mxu0 %v404
        %529 = vmatprep.subr.mxu0 0.0
        %530 = vmatpush1.msra.mxu0 %v407
        %531 = vmatprep.subr.mxu0 0.0
        %532 = vmatpush1.msra.mxu0 %v410
        %533 = vmatprep.subr.mxu0 0.0
        %534 = vmatpush1.msra.mxu0 %v413
        %535 = vmatprep.subr.mxu0 0.0
        %536 = vmatpush1.msra.mxu0 %v416
        %537 = vmatprep.subr.mxu0 0.0
        %538 = vmatpush1.msra.mxu0 %v419
        %539 = vmatprep.subr.mxu0 0.0
        %540 = vmatpush1.msra.mxu0 %v422
        %541 = vmatprep.subr.mxu0 0.0
        %542 = vmatpush1.msra.mxu0 %v425
        %543 = vmatprep.subr.mxu0 0.0
        %544 = vmatpush1.msra.mxu0 %v428
        %545 = vmatprep.subr.mxu0 0.0
        %546 = vmatpush1.msra.mxu0 0.0
        %547 = vmatprep.subr.mxu0 0.0
        %548 = vmatpush1.msra.mxu0 0.0
        %549 = vmatprep.subr.mxu0 0.0
        %550 = vmatpush1.msra.mxu0 0.0
        %551 = vmatprep.subr.mxu0 0.0
        %552 = vmatpush1.msra.mxu0 0.0
        %553 = vmatprep.subr.mxu0 0.0
        %554 = vmatpush1.msra.mxu0 0.0
        %555 = vmatprep.subr.mxu0 0.0
        %556 = vmatpush1.msra.mxu0 0.0
        %557 = vmatprep.subr.mxu0 0.0
        %558 = vmatpush1.msra.mxu0 0.0
        %559 = vmatprep.subr.mxu0 0.0
        %560 = vmatpush1.msra.mxu0 0.0
        %561 = vmatprep.subr.mxu0 0.0
        %562 = vmatpush1.msra.mxu0 0.0
        %563 = vmatprep.subr.mxu0 0.0
        %564 = vmatpush1.msra.mxu0 0.0
        %565 = vmatprep.subr.mxu0 0.0
        %566 = vmatpush1.msra.mxu0 0.0
        %567 = vmatprep.subr.mxu0 0.0
        %568 = vmatpush1.msra.mxu0 0.0
        %569 = vmatprep.subr.mxu0 0.0
        %570 = vmatpush1.msra.mxu0 0.0
        %571 = vmatprep.subr.mxu0 0.0
        %572 = vmatpush1.msra.mxu0 0.0
        %573 = vmatprep.subr.mxu0 0.0
        %574 = vmatpush1.msra.mxu0 0.0
        %575 = vmatprep.subr.mxu0 0.0
        %576 = vmatpush1.msra.mxu0 0.0
        %577 = vmatprep.subr.mxu0 0.0
        %578 = vmatpush1.msra.mxu0 0.0
        %579 = vmatprep.subr.mxu0 0.0
        %580 = vmatpush1.msra.mxu0 0.0
        %581 = vmatprep.subr.mxu0 0.0
        %582 = vmatpush1.msra.mxu0 0.0
        %583 = vmatprep.subr.mxu0 0.0
        %584 = vmatpush1.msra.mxu0 0.0
        %585 = vmatprep.mubr.f32.mxu0 0.0
        %586 = vmatmul.mubr.f32.gmra.mrb[0].mxu0 %v448
        %v587 = vpop.f32.mrb[0].mxu0
        %v588 = vadd.f32 %v442, %v587
        %v589 = vpop.f32.mrb[0].mxu0
        %590 = vdwg.mxu0
        %v591 = vmul.f32 %v517, %v519
        %v592 = vld [vmem:[%s3] sm:$0xff]
        %v593 = vld [vmem:[%s3 + $0x8] sm:$0xff]
        %v594 = vld [vmem:[%s3 + $0x10] sm:$0xff]
        %v595 = vld [vmem:[%s3 + $0x18] sm:$0xff]
        %v596 = vld [vmem:[%s3 + $0x20] sm:$0xff]
        %v597 = vld [vmem:[%s3 + $0x28] sm:$0xff]
        %v598 = vld [vmem:[%s3 + $0x30] sm:$0xff]
        %v599 = vld [vmem:[%s3 + $0x38] sm:$0xff]
        %v600 = vld [vmem:[%s3 + $0x40] sm:$0xff]
        %v601 = vld [vmem:[%s3 + $0x48] sm:$0xff]
        %v602 = vld [vmem:[%s3 + $0x50] sm:$0xff]
        %v603 = vld [vmem:[%s3 + $0x58] sm:$0xff]
        %v604 = vld [vmem:[%s3 + $0x60] sm:$0xff]
        %v605 = vld [vmem:[%s3 + $0x68] sm:$0xff]
        %v606 = vld [vmem:[%s3 + $0x70] sm:$0xff]
        %v607 = vld [vmem:[%s3 + $0x78] sm:$0xff]
        %608 = vmatprep.subr.mxu0 0.0
        %609 = vmatpush1.msra.mxu0 %v592
        %610 = vmatprep.subr.mxu0 0.0
        %611 = vmatpush1.msra.mxu0 %v593
        %612 = vmatprep.subr.mxu0 0.0
        %613 = vmatpush1.msra.mxu0 %v594
        %614 = vmatprep.subr.mxu0 0.0
        %615 = vmatpush1.msra.mxu0 %v595
        %616 = vmatprep.subr.mxu0 0.0
        %617 = vmatpush1.msra.mxu0 %v596
        %618 = vmatprep.subr.mxu0 0.0
        %619 = vmatpush1.msra.mxu0 %v597
        %620 = vmatprep.subr.mxu0 0.0
        %621 = vmatpush1.msra.mxu0 %v598
        %622 = vmatprep.subr.mxu0 0.0
        %623 = vmatpush1.msra.mxu0 %v599
        %624 = vmatprep.subr.mxu0 0.0
        %625 = vmatpush1.msra.mxu0 %v600
        %626 = vmatprep.subr.mxu0 0.0
        %627 = vmatpush1.msra.mxu0 %v601
        %628 = vmatprep.subr.mxu0 0.0
        %629 = vmatpush1.msra.mxu0 %v602
        %630 = vmatprep.subr.mxu0 0.0
        %631 = vmatpush1.msra.mxu0 %v603
        %632 = vmatprep.subr.mxu0 0.0
        %633 = vmatpush1.msra.mxu0 %v604
        %634 = vmatprep.subr.mxu0 0.0
        %635 = vmatpush1.msra.mxu0 %v605
        %636 = vmatprep.subr.mxu0 0.0
        %637 = vmatpush1.msra.mxu0 %v606
        %638 = vmatprep.subr.mxu0 0.0
        %639 = vmatpush1.msra.mxu0 %v607
        %640 = vmatprep.subr.mxu0 0.0
        %641 = vmatpush1.msra.mxu0 0.0
        %642 = vmatprep.subr.mxu0 0.0
        %643 = vmatpush1.msra.mxu0 0.0
        %644 = vmatprep.subr.mxu0 0.0
        %645 = vmatpush1.msra.mxu0 0.0
        %646 = vmatprep.subr.mxu0 0.0
        %647 = vmatpush1.msra.mxu0 0.0
        %648 = vmatprep.subr.mxu0 0.0
        %649 = vmatpush1.msra.mxu0 0.0
        %650 = vmatprep.subr.mxu0 0.0
        %651 = vmatpush1.msra.mxu0 0.0
        %652 = vmatprep.subr.mxu0 0.0
        %653 = vmatpush1.msra.mxu0 0.0
        %654 = vmatprep.subr.mxu0 0.0
        %655 = vmatpush1.msra.mxu0 0.0
        %656 = vmatprep.subr.mxu0 0.0
        %657 = vmatpush1.msra.mxu0 0.0
        %658 = vmatprep.subr.mxu0 0.0
        %659 = vmatpush1.msra.mxu0 0.0
        %660 = vmatprep.subr.mxu0 0.0
        %661 = vmatpush1.msra.mxu0 0.0
        %662 = vmatprep.subr.mxu0 0.0
        %663 = vmatpush1.msra.mxu0 0.0
        %664 = vmatprep.subr.mxu0 0.0
        %665 = vmatpush1.msra.mxu0 0.0
        %666 = vmatprep.subr.mxu0 0.0
        %667 = vmatpush1.msra.mxu0 0.0
        %668 = vmatprep.subr.mxu0 0.0
        %669 = vmatpush1.msra.mxu0 0.0
        %670 = vmatprep.subr.mxu0 0.0
        %671 = vmatpush1.msra.mxu0 0.0
        %672 = vmatprep.mubr.f32.mxu0 0.0
        %673 = vmatmul.mubr.f32.gmra.mrb[0].mxu0 %v591
        %v674 = vpop.f32.mrb[0].mxu0
        %v675 = vadd.f32 0.0, %v674
        %v676 = vpop.f32.mrb[0].mxu0
        %677 = vdwg.mxu0
        %v678 = vmul.f32 %v675, %v588
        %v679 = vld [vmem:[%s4] sm:$0xff]
        %v680 = vld [vmem:[%s4 + $0x8] sm:$0xff]
        %v681 = vld [vmem:[%s4 + $0x10] sm:$0xff]
        %v682 = vld [vmem:[%s4 + $0x18] sm:$0xff]
        %v683 = vld [vmem:[%s4 + $0x20] sm:$0xff]
        %v684 = vld [vmem:[%s4 + $0x28] sm:$0xff]
        %v685 = vld [vmem:[%s4 + $0x30] sm:$0xff]
        %v686 = vld [vmem:[%s4 + $0x38] sm:$0xff]
        %v687 = vld [vmem:[%s4 + $0x40] sm:$0xff]
        %v688 = vld [vmem:[%s4 + $0x48] sm:$0xff]
        %v689 = vld [vmem:[%s4 + $0x50] sm:$0xff]
        %v690 = vld [vmem:[%s4 + $0x58] sm:$0xff]
        %v691 = vld [vmem:[%s4 + $0x60] sm:$0xff]
        %v692 = vld [vmem:[%s4 + $0x68] sm:$0xff]
        %v693 = vld [vmem:[%s4 + $0x70] sm:$0xff]
        %v694 = vld [vmem:[%s4 + $0x78] sm:$0xff]
        %695 = vmatprep.subr.mxu0 0.0
        %696 = vmatpush1.msra.mxu0 %v679
        %697 = vmatprep.subr.mxu0 0.0
        %698 = vmatpush1.msra.mxu0 %v680
        %699 = vmatprep.subr.mxu0 0.0
        %700 = vmatpush1.msra.mxu0 %v681
        %701 = vmatprep.subr.mxu0 0.0
        %702 = vmatpush1.msra.mxu0 %v682
        %703 = vmatprep.subr.mxu0 0.0
        %704 = vmatpush1.msra.mxu0 %v683
        %705 = vmatprep.subr.mxu0 0.0
        %706 = vmatpush1.msra.mxu0 %v684
        %707 = vmatprep.subr.mxu0 0.0
        %708 = vmatpush1.msra.mxu0 %v685
        %709 = vmatprep.subr.mxu0 0.0
        %710 = vmatpush1.msra.mxu0 %v686
        %711 = vmatprep.subr.mxu0 0.0
        %712 = vmatpush1.msra.mxu0 %v687
        %713 = vmatprep.subr.mxu0 0.0
        %714 = vmatpush1.msra.mxu0 %v688
        %715 = vmatprep.subr.mxu0 0.0
        %716 = vmatpush1.msra.mxu0 %v689
        %717 = vmatprep.subr.mxu0 0.0
        %718 = vmatpush1.msra.mxu0 %v690
        %719 = vmatprep.subr.mxu0 0.0
        %720 = vmatpush1.msra.mxu0 %v691
        %721 = vmatprep.subr.mxu0 0.0
        %722 = vmatpush1.msra.mxu0 %v692
        %723 = vmatprep.subr.mxu0 0.0
        %724 = vmatpush1.msra.mxu0 %v693
        %725 = vmatprep.subr.mxu0 0.0
        %726 = vmatpush1.msra.mxu0 %v694
        %727 = vmatprep.subr.mxu0 0.0
        %728 = vmatpush1.msra.mxu0 0.0
        %729 = vmatprep.subr.mxu0 0.0
        %730 = vmatpush1.msra.mxu0 0.0
        %731 = vmatprep.subr.mxu0 0.0
        %732 = vmatpush1.msra.mxu0 0.0
        %733 = vmatprep.subr.mxu0 0.0
        %734 = vmatpush1.msra.mxu0 0.0
        %735 = vmatprep.subr.mxu0 0.0
        %736 = vmatpush1.msra.mxu0 0.0
        %737 = vmatprep.subr.mxu0 0.0
        %738 = vmatpush1.msra.mxu0 0.0
        %739 = vmatprep.subr.mxu0 0.0
        %740 = vmatpush1.msra.mxu0 0.0
        %741 = vmatprep.subr.mxu0 0.0
        %742 = vmatpush1.msra.mxu0 0.0
        %743 = vmatprep.subr.mxu0 0.0
        %744 = vmatpush1.msra.mxu0 0.0
        %745 = vmatprep.subr.mxu0 0.0
        %746 = vmatpush1.msra.mxu0 0.0
        %747 = vmatprep.subr.mxu0 0.0
        %748 = vmatpush1.msra.mxu0 0.0
        %749 = vmatprep.subr.mxu0 0.0
        %750 = vmatpush1.msra.mxu0 0.0
        %751 = vmatprep.subr.mxu0 0.0
        %752 = vmatpush1.msra.mxu0 0.0
        %753 = vmatprep.subr.mxu0 0.0
        %754 = vmatpush1.msra.mxu0 0.0
        %755 = vmatprep.subr.mxu0 0.0
        %756 = vmatpush1.msra.mxu0 0.0
        %757 = vmatprep.subr.mxu0 0.0
        %758 = vmatpush1.msra.mxu0 0.0
        %759 = vmatprep.mubr.f32.mxu0 0.0
        %760 = vmatmul.mubr.f32.gmra.mrb[0].mxu0 %v678
        %v761 = vpop.f32.mrb[0].mxu0
        %v762 = vadd.f32 0.0, %v761
        %v763 = vpop.f32.mrb[0].mxu0
        %764 = vdwg.mxu0
        %v765 = vld [vmem:[%s6] sm:$0xff]
        %v766 = vmul.f32 %v762, %v765
        %v767 = vld [vmem:[#allocation7] sm:$0xff]
        %v768 = vld [vmem:[#allocation7 + $0x8] sm:$0xff]
        %v769 = vld [vmem:[#allocation7 + $0x10] sm:$0xff]
        %v770 = vld [vmem:[#allocation7 + $0x18] sm:$0xff]
        %vm771 = vcmask 261120
        %v773 = vsel %vm771, %v766, 0
        %775 = vmatprep.subr.mxu0 0.0
        %776 = vmatpush1.msra.mxu0 %v767
        %777 = vmatprep.subr.mxu0 0.0
        %778 = vmatpush1.msra.mxu0 %v768
        %779 = vmatprep.subr.mxu0 0.0
        %780 = vmatpush1.msra.mxu0 %v769
        %781 = vmatprep.subr.mxu0 0.0
        %782 = vmatpush1.msra.mxu0 %v770
        %783 = vmatprep.subr.mxu0 0.0
        %784 = vmatpush1.msra.mxu0 0.0
        %785 = vmatprep.subr.mxu0 0.0
        %786 = vmatpush1.msra.mxu0 0.0
        %787 = vmatprep.subr.mxu0 0.0
        %788 = vmatpush1.msra.mxu0 0.0
        %789 = vmatprep.subr.mxu0 0.0
        %790 = vmatpush1.msra.mxu0 0.0
        %791 = vmatprep.subr.mxu0 0.0
        %792 = vmatpush1.msra.mxu0 0.0
        %793 = vmatprep.subr.mxu0 0.0
        %794 = vmatpush1.msra.mxu0 0.0
        %795 = vmatprep.subr.mxu0 0.0
        %796 = vmatpush1.msra.mxu0 0.0
        %797 = vmatprep.subr.mxu0 0.0
        %798 = vmatpush1.msra.mxu0 0.0
        %799 = vmatprep.subr.mxu0 0.0
        %800 = vmatpush1.msra.mxu0 0.0
        %801 = vmatprep.subr.mxu0 0.0
        %802 = vmatpush1.msra.mxu0 0.0
        %803 = vmatprep.subr.mxu0 0.0
        %804 = vmatpush1.msra.mxu0 0.0
        %805 = vmatprep.subr.mxu0 0.0
        %806 = vmatpush1.msra.mxu0 0.0
        %807 = vmatprep.subr.mxu0 0.0
        %808 = vmatpush1.msra.mxu0 0.0
        %809 = vmatprep.subr.mxu0 0.0
        %810 = vmatpush1.msra.mxu0 0.0
        %811 = vmatprep.subr.mxu0 0.0
        %812 = vmatpush1.msra.mxu0 0.0
        %813 = vmatprep.subr.mxu0 0.0
        %814 = vmatpush1.msra.mxu0 0.0
        %815 = vmatprep.subr.mxu0 0.0
        %816 = vmatpush1.msra.mxu0 0.0
        %817 = vmatprep.subr.mxu0 0.0
        %818 = vmatpush1.msra.mxu0 0.0
        %819 = vmatprep.subr.mxu0 0.0
        %820 = vmatpush1.msra.mxu0 0.0
        %821 = vmatprep.subr.mxu0 0.0
        %822 = vmatpush1.msra.mxu0 0.0
        %823 = vmatprep.subr.mxu0 0.0
        %824 = vmatpush1.msra.mxu0 0.0
        %825 = vmatprep.subr.mxu0 0.0
        %826 = vmatpush1.msra.mxu0 0.0
        %827 = vmatprep.subr.mxu0 0.0
        %828 = vmatpush1.msra.mxu0 0.0
        %829 = vmatprep.subr.mxu0 0.0
        %830 = vmatpush1.msra.mxu0 0.0
        %831 = vmatprep.subr.mxu0 0.0
        %832 = vmatpush1.msra.mxu0 0.0
        %833 = vmatprep.subr.mxu0 0.0
        %834 = vmatpush1.msra.mxu0 0.0
        %835 = vmatprep.subr.mxu0 0.0
        %836 = vmatpush1.msra.mxu0 0.0
        %837 = vmatprep.subr.mxu0 0.0
        %838 = vmatpush1.msra.mxu0 0.0
        %839 = vmatprep.mubr.f32.mxu0 0.0
        %840 = vmatmul.mubr.f32.gmra.mrb[0].mxu0 %v773
        %v841 = vpop.f32.mrb[0].mxu0
        %v842 = vadd.f32 0.0, %v841
        %v843 = vpop.f32.mrb[0].mxu0
        %844 = vdwg.mxu0
        %v845 = vld [vmem:[#allocation8] sm:$0xff]
        %s846 = scalar_lea.vmem %s6, 8
        %v847 = vld [vmem:[%s846] sm:$0xff]
        %v848 = vmul.f32 %v762, %v847
        %s849 = scalar_lea.vmem [#allocation7], 32
        %v850 = vld [vmem:[%s849] sm:$0xff]
        %v851 = vld [vmem:[%s849 + $0x8] sm:$0xff]
        %v852 = vld [vmem:[%s849 + $0x10] sm:$0xff]
        %v853 = vld [vmem:[%s849 + $0x18] sm:$0xff]
        %v855 = vsel %vm771, %v848, 0
        %857 = vmatprep.subr.mxu0 0.0
        %858 = vmatpush1.msra.mxu0 %v850
        %859 = vmatprep.subr.mxu0 0.0
        %860 = vmatpush1.msra.mxu0 %v851
        %861 = vmatprep.subr.mxu0 0.0
        %862 = vmatpush1.msra.mxu0 %v852
        %863 = vmatprep.subr.mxu0 0.0
        %864 = vmatpush1.msra.mxu0 %v853
        %865 = vmatprep.subr.mxu0 0.0
        %866 = vmatpush1.msra.mxu0 0.0
        %867 = vmatprep.subr.mxu0 0.0
        %868 = vmatpush1.msra.mxu0 0.0
        %869 = vmatprep.subr.mxu0 0.0
        %870 = vmatpush1.msra.mxu0 0.0
        %871 = vmatprep.subr.mxu0 0.0
        %872 = vmatpush1.msra.mxu0 0.0
        %873 = vmatprep.subr.mxu0 0.0
        %874 = vmatpush1.msra.mxu0 0.0
        %875 = vmatprep.subr.mxu0 0.0
        %876 = vmatpush1.msra.mxu0 0.0
        %877 = vmatprep.subr.mxu0 0.0
        %878 = vmatpush1.msra.mxu0 0.0
        %879 = vmatprep.subr.mxu0 0.0
        %880 = vmatpush1.msra.mxu0 0.0
        %881 = vmatprep.subr.mxu0 0.0
        %882 = vmatpush1.msra.mxu0 0.0
        %883 = vmatprep.subr.mxu0 0.0
        %884 = vmatpush1.msra.mxu0 0.0
        %885 = vmatprep.subr.mxu0 0.0
        %886 = vmatpush1.msra.mxu0 0.0
        %887 = vmatprep.subr.mxu0 0.0
        %888 = vmatpush1.msra.mxu0 0.0
        %889 = vmatprep.subr.mxu0 0.0
        %890 = vmatpush1.msra.mxu0 0.0
        %891 = vmatprep.subr.mxu0 0.0
        %892 = vmatpush1.msra.mxu0 0.0
        %893 = vmatprep.subr.mxu0 0.0
        %894 = vmatpush1.msra.mxu0 0.0
        %895 = vmatprep.subr.mxu0 0.0
        %896 = vmatpush1.msra.mxu0 0.0
        %897 = vmatprep.subr.mxu0 0.0
        %898 = vmatpush1.msra.mxu0 0.0
        %899 = vmatprep.subr.mxu0 0.0
        %900 = vmatpush1.msra.mxu0 0.0
        %901 = vmatprep.subr.mxu0 0.0
        %902 = vmatpush1.msra.mxu0 0.0
        %903 = vmatprep.subr.mxu0 0.0
        %904 = vmatpush1.msra.mxu0 0.0
        %905 = vmatprep.subr.mxu0 0.0
        %906 = vmatpush1.msra.mxu0 0.0
        %907 = vmatprep.subr.mxu0 0.0
        %908 = vmatpush1.msra.mxu0 0.0
        %909 = vmatprep.subr.mxu0 0.0
        %910 = vmatpush1.msra.mxu0 0.0
        %911 = vmatprep.subr.mxu0 0.0
        %912 = vmatpush1.msra.mxu0 0.0
        %913 = vmatprep.subr.mxu0 0.0
        %914 = vmatpush1.msra.mxu0 0.0
        %915 = vmatprep.subr.mxu0 0.0
        %916 = vmatpush1.msra.mxu0 0.0
        %917 = vmatprep.subr.mxu0 0.0
        %918 = vmatpush1.msra.mxu0 0.0
        %919 = vmatprep.subr.mxu0 0.0
        %920 = vmatpush1.msra.mxu0 0.0
        %921 = vmatprep.mubr.f32.mxu0 0.0
        %922 = vmatmul.mubr.f32.gmra.mrb[0].mxu0 %v855
        %v923 = vpop.f32.mrb[0].mxu0
        %v924 = vadd.f32 0.0, %v923
        %v925 = vpop.f32.mrb[0].mxu0
        %926 = vdwg.mxu0
        %s927 = scalar_lea.vmem [#allocation8], 8
        %v928 = vld [vmem:[%s927] sm:$0xff]
        %vm929 = vcmask 64512
        %v931 = vsel %vm929, %v928, 0
        %933 = vmatprep.subr.mxu0 0.0
        %934 = vmatpush1.msra.mxu0 %v924
        %935 = vmatprep.subr.mxu0 0.0
        %936 = vmatpush1.msra.mxu0 0.0
        %937 = vmatprep.subr.mxu0 0.0
        %938 = vmatpush1.msra.mxu0 0.0
        %939 = vmatprep.subr.mxu0 0.0
        %940 = vmatpush1.msra.mxu0 0.0
        %941 = vmatprep.subr.mxu0 0.0
        %942 = vmatpush1.msra.mxu0 0.0
        %943 = vmatprep.subr.mxu0 0.0
        %944 = vmatpush1.msra.mxu0 0.0
        %945 = vmatprep.subr.mxu0 0.0
        %946 = vmatpush1.msra.mxu0 0.0
        %947 = vmatprep.subr.mxu0 0.0
        %948 = vmatpush1.msra.mxu0 0.0
        %949 = vmatprep.subr.mxu0 0.0
        %950 = vmatpush1.msra.mxu0 0.0
        %951 = vmatprep.subr.mxu0 0.0
        %952 = vmatpush1.msra.mxu0 0.0
        %953 = vmatprep.subr.mxu0 0.0
        %954 = vmatpush1.msra.mxu0 0.0
        %955 = vmatprep.subr.mxu0 0.0
        %956 = vmatpush1.msra.mxu0 0.0
        %957 = vmatprep.subr.mxu0 0.0
        %958 = vmatpush1.msra.mxu0 0.0
        %959 = vmatprep.subr.mxu0 0.0
        %960 = vmatpush1.msra.mxu0 0.0
        %961 = vmatprep.subr.mxu0 0.0
        %962 = vmatpush1.msra.mxu0 0.0
        %963 = vmatprep.subr.mxu0 0.0
        %964 = vmatpush1.msra.mxu0 0.0
        %965 = vmatprep.subr.mxu0 0.0
        %966 = vmatpush1.msra.mxu0 0.0
        %967 = vmatprep.subr.mxu0 0.0
        %968 = vmatpush1.msra.mxu0 0.0
        %969 = vmatprep.subr.mxu0 0.0
        %970 = vmatpush1.msra.mxu0 0.0
        %971 = vmatprep.subr.mxu0 0.0
        %972 = vmatpush1.msra.mxu0 0.0
        %973 = vmatprep.subr.mxu0 0.0
        %974 = vmatpush1.msra.mxu0 0.0
        %975 = vmatprep.subr.mxu0 0.0
        %976 = vmatpush1.msra.mxu0 0.0
        %977 = vmatprep.subr.mxu0 0.0
        %978 = vmatpush1.msra.mxu0 0.0
        %979 = vmatprep.subr.mxu0 0.0
        %980 = vmatpush1.msra.mxu0 0.0
        %981 = vmatprep.subr.mxu0 0.0
        %982 = vmatpush1.msra.mxu0 0.0
        %983 = vmatprep.subr.mxu0 0.0
        %984 = vmatpush1.msra.mxu0 0.0
        %985 = vmatprep.subr.mxu0 0.0
        %986 = vmatpush1.msra.mxu0 0.0
        %987 = vmatprep.subr.mxu0 0.0
        %988 = vmatpush1.msra.mxu0 0.0
        %989 = vmatprep.subr.mxu0 0.0
        %990 = vmatpush1.msra.mxu0 0.0
        %991 = vmatprep.subr.mxu0 0.0
        %992 = vmatpush1.msra.mxu0 0.0
        %993 = vmatprep.subr.mxu0 0.0
        %994 = vmatpush1.msra.mxu0 0.0
        %995 = vmatprep.subr.mxu0 0.0
        %996 = vmatpush1.msra.mxu0 0.0
        %997 = vmatprep.mubr.f32.mxu0 0.0
        %998 = vmatmul.mubr.f32.gmra.mrb[0].mxu0 %v931
        %v999 = vpop.f32.mrb[0].mxu0
        %v1000 = vadd.f32 0.0, %v999
        %v1001 = vpop.f32.mrb[0].mxu0
        %1002 = vdwg.mxu0
        %v1004 = vsel %vm929, %v845, 0
        %1006 = vmatprep.subr.mxu0 0.0
        %1007 = vmatpush1.msra.mxu0 %v842
        %1008 = vmatprep.subr.mxu0 0.0
        %1009 = vmatpush1.msra.mxu0 0.0
        %1010 = vmatprep.subr.mxu0 0.0
        %1011 = vmatpush1.msra.mxu0 0.0
        %1012 = vmatprep.subr.mxu0 0.0
        %1013 = vmatpush1.msra.mxu0 0.0
        %1014 = vmatprep.subr.mxu0 0.0
        %1015 = vmatpush1.msra.mxu0 0.0
        %1016 = vmatprep.subr.mxu0 0.0
        %1017 = vmatpush1.msra.mxu0 0.0
        %1018 = vmatprep.subr.mxu0 0.0
        %1019 = vmatpush1.msra.mxu0 0.0
        %1020 = vmatprep.subr.mxu0 0.0
        %1021 = vmatpush1.msra.mxu0 0.0
        %1022 = vmatprep.subr.mxu0 0.0
        %1023 = vmatpush1.msra.mxu0 0.0
        %1024 = vmatprep.subr.mxu0 0.0
        %1025 = vmatpush1.msra.mxu0 0.0
        %1026 = vmatprep.subr.mxu0 0.0
        %1027 = vmatpush1.msra.mxu0 0.0
        %1028 = vmatprep.subr.mxu0 0.0
        %1029 = vmatpush1.msra.mxu0 0.0
        %1030 = vmatprep.subr.mxu0 0.0
        %1031 = vmatpush1.msra.mxu0 0.0
        %1032 = vmatprep.subr.mxu0 0.0
        %1033 = vmatpush1.msra.mxu0 0.0
        %1034 = vmatprep.subr.mxu0 0.0
        %1035 = vmatpush1.msra.mxu0 0.0
        %1036 = vmatprep.subr.mxu0 0.0
        %1037 = vmatpush1.msra.mxu0 0.0
        %1038 = vmatprep.subr.mxu0 0.0
        %1039 = vmatpush1.msra.mxu0 0.0
        %1040 = vmatprep.subr.mxu0 0.0
        %1041 = vmatpush1.msra.mxu0 0.0
        %1042 = vmatprep.subr.mxu0 0.0
        %1043 = vmatpush1.msra.mxu0 0.0
        %1044 = vmatprep.subr.mxu0 0.0
        %1045 = vmatpush1.msra.mxu0 0.0
        %1046 = vmatprep.subr.mxu0 0.0
        %1047 = vmatpush1.msra.mxu0 0.0
        %1048 = vmatprep.subr.mxu0 0.0
        %1049 = vmatpush1.msra.mxu0 0.0
        %1050 = vmatprep.subr.mxu0 0.0
        %1051 = vmatpush1.msra.mxu0 0.0
        %1052 = vmatprep.subr.mxu0 0.0
        %1053 = vmatpush1.msra.mxu0 0.0
        %1054 = vmatprep.subr.mxu0 0.0
        %1055 = vmatpush1.msra.mxu0 0.0
        %1056 = vmatprep.subr.mxu0 0.0
        %1057 = vmatpush1.msra.mxu0 0.0
        %1058 = vmatprep.subr.mxu0 0.0
        %1059 = vmatpush1.msra.mxu0 0.0
        %1060 = vmatprep.subr.mxu0 0.0
        %1061 = vmatpush1.msra.mxu0 0.0
        %1062 = vmatprep.subr.mxu0 0.0
        %1063 = vmatpush1.msra.mxu0 0.0
        %1064 = vmatprep.subr.mxu0 0.0
        %1065 = vmatpush1.msra.mxu0 0.0
        %1066 = vmatprep.subr.mxu0 0.0
        %1067 = vmatpush1.msra.mxu0 0.0
        %1068 = vmatprep.subr.mxu0 0.0
        %1069 = vmatpush1.msra.mxu0 0.0
        %1070 = vmatprep.mubr.f32.mxu0 0.0
        %1071 = vmatmul.mubr.f32.gmra.mrb[0].mxu0 %v1004
        %v1072 = vpop.f32.mrb[0].mxu0
        %v1073 = vadd.f32 %v1000, %v1072
        %v1074 = vpop.f32.mrb[0].mxu0
        %1075 = vdwg.mxu0
        %s1076 = scalar_lea.vmem %s6, 16
        %v1077 = vld [vmem:[%s1076] sm:$0xff]
        %v1078 = vmul.f32 %v762, %v1077
        %s1079 = scalar_lea.vmem [#allocation7], 64
        %v1080 = vld [vmem:[%s1079] sm:$0xff]
        %v1081 = vld [vmem:[%s1079 + $0x8] sm:$0xff]
        %v1082 = vld [vmem:[%s1079 + $0x10] sm:$0xff]
        %v1083 = vld [vmem:[%s1079 + $0x18] sm:$0xff]
        %v1085 = vsel %vm771, %v1078, 0
        %1087 = vmatprep.subr.mxu0 0.0
        %1088 = vmatpush1.msra.mxu0 %v1080
        %1089 = vmatprep.subr.mxu0 0.0
        %1090 = vmatpush1.msra.mxu0 %v1081
        %1091 = vmatprep.subr.mxu0 0.0
        %1092 = vmatpush1.msra.mxu0 %v1082
        %1093 = vmatprep.subr.mxu0 0.0
        %1094 = vmatpush1.msra.mxu0 %v1083
        %1095 = vmatprep.subr.mxu0 0.0
        %1096 = vmatpush1.msra.mxu0 0.0
        %1097 = vmatprep.subr.mxu0 0.0
        %1098 = vmatpush1.msra.mxu0 0.0
        %1099 = vmatprep.subr.mxu0 0.0
        %1100 = vmatpush1.msra.mxu0 0.0
        %1101 = vmatprep.subr.mxu0 0.0
        %1102 = vmatpush1.msra.mxu0 0.0
        %1103 = vmatprep.subr.mxu0 0.0
        %1104 = vmatpush1.msra.mxu0 0.0
        %1105 = vmatprep.subr.mxu0 0.0
        %1106 = vmatpush1.msra.mxu0 0.0
        %1107 = vmatprep.subr.mxu0 0.0
        %1108 = vmatpush1.msra.mxu0 0.0
        %1109 = vmatprep.subr.mxu0 0.0
        %1110 = vmatpush1.msra.mxu0 0.0
        %1111 = vmatprep.subr.mxu0 0.0
        %1112 = vmatpush1.msra.mxu0 0.0
        %1113 = vmatprep.subr.mxu0 0.0
        %1114 = vmatpush1.msra.mxu0 0.0
        %1115 = vmatprep.subr.mxu0 0.0
        %1116 = vmatpush1.msra.mxu0 0.0
        %1117 = vmatprep.subr.mxu0 0.0
        %1118 = vmatpush1.msra.mxu0 0.0
        %1119 = vmatprep.subr.mxu0 0.0
        %1120 = vmatpush1.msra.mxu0 0.0
        %1121 = vmatprep.subr.mxu0 0.0
        %1122 = vmatpush1.msra.mxu0 0.0
        %1123 = vmatprep.subr.mxu0 0.0
        %1124 = vmatpush1.msra.mxu0 0.0
        %1125 = vmatprep.subr.mxu0 0.0
        %1126 = vmatpush1.msra.mxu0 0.0
        %1127 = vmatprep.subr.mxu0 0.0
        %1128 = vmatpush1.msra.mxu0 0.0
        %1129 = vmatprep.subr.mxu0 0.0
        %1130 = vmatpush1.msra.mxu0 0.0
        %1131 = vmatprep.subr.mxu0 0.0
        %1132 = vmatpush1.msra.mxu0 0.0
        %1133 = vmatprep.subr.mxu0 0.0
        %1134 = vmatpush1.msra.mxu0 0.0
        %1135 = vmatprep.subr.mxu0 0.0
        %1136 = vmatpush1.msra.mxu0 0.0
        %1137 = vmatprep.subr.mxu0 0.0
        %1138 = vmatpush1.msra.mxu0 0.0
        %1139 = vmatprep.subr.mxu0 0.0
        %1140 = vmatpush1.msra.mxu0 0.0
        %1141 = vmatprep.subr.mxu0 0.0
        %1142 = vmatpush1.msra.mxu0 0.0
        %1143 = vmatprep.subr.mxu0 0.0
        %1144 = vmatpush1.msra.mxu0 0.0
        %1145 = vmatprep.subr.mxu0 0.0
        %1146 = vmatpush1.msra.mxu0 0.0
        %1147 = vmatprep.subr.mxu0 0.0
        %1148 = vmatpush1.msra.mxu0 0.0
        %1149 = vmatprep.subr.mxu0 0.0
        %1150 = vmatpush1.msra.mxu0 0.0
        %1151 = vmatprep.mubr.f32.mxu0 0.0
        %1152 = vmatmul.mubr.f32.gmra.mrb[0].mxu0 %v1085
        %v1153 = vpop.f32.mrb[0].mxu0
        %v1154 = vadd.f32 0.0, %v1153
        %v1155 = vpop.f32.mrb[0].mxu0
        %1156 = vdwg.mxu0
        %s1157 = scalar_lea.vmem [#allocation8], 16
        %v1158 = vld [vmem:[%s1157] sm:$0xff]
        %v1160 = vsel %vm929, %v1158, 0
        %1162 = vmatprep.subr.mxu0 0.0
        %1163 = vmatpush1.msra.mxu0 %v1154
        %1164 = vmatprep.subr.mxu0 0.0
        %1165 = vmatpush1.msra.mxu0 0.0
        %1166 = vmatprep.subr.mxu0 0.0
        %1167 = vmatpush1.msra.mxu0 0.0
        %1168 = vmatprep.subr.mxu0 0.0
        %1169 = vmatpush1.msra.mxu0 0.0
        %1170 = vmatprep.subr.mxu0 0.0
        %1171 = vmatpush1.msra.mxu0 0.0
        %1172 = vmatprep.subr.mxu0 0.0
        %1173 = vmatpush1.msra.mxu0 0.0
        %1174 = vmatprep.subr.mxu0 0.0
        %1175 = vmatpush1.msra.mxu0 0.0
        %1176 = vmatprep.subr.mxu0 0.0
        %1177 = vmatpush1.msra.mxu0 0.0
        %1178 = vmatprep.subr.mxu0 0.0
        %1179 = vmatpush1.msra.mxu0 0.0
        %1180 = vmatprep.subr.mxu0 0.0
        %1181 = vmatpush1.msra.mxu0 0.0
        %1182 = vmatprep.subr.mxu0 0.0
        %1183 = vmatpush1.msra.mxu0 0.0
        %1184 = vmatprep.subr.mxu0 0.0
        %1185 = vmatpush1.msra.mxu0 0.0
        %1186 = vmatprep.subr.mxu0 0.0
        %1187 = vmatpush1.msra.mxu0 0.0
        %1188 = vmatprep.subr.mxu0 0.0
        %1189 = vmatpush1.msra.mxu0 0.0
        %1190 = vmatprep.subr.mxu0 0.0
        %1191 = vmatpush1.msra.mxu0 0.0
        %1192 = vmatprep.subr.mxu0 0.0
        %1193 = vmatpush1.msra.mxu0 0.0
        %1194 = vmatprep.subr.mxu0 0.0
        %1195 = vmatpush1.msra.mxu0 0.0
        %1196 = vmatprep.subr.mxu0 0.0
        %1197 = vmatpush1.msra.mxu0 0.0
        %1198 = vmatprep.subr.mxu0 0.0
        %1199 = vmatpush1.msra.mxu0 0.0
        %1200 = vmatprep.subr.mxu0 0.0
        %1201 = vmatpush1.msra.mxu0 0.0
        %1202 = vmatprep.subr.mxu0 0.0
        %1203 = vmatpush1.msra.mxu0 0.0
        %1204 = vmatprep.subr.mxu0 0.0
        %1205 = vmatpush1.msra.mxu0 0.0
        %1206 = vmatprep.subr.mxu0 0.0
        %1207 = vmatpush1.msra.mxu0 0.0
        %1208 = vmatprep.subr.mxu0 0.0
        %1209 = vmatpush1.msra.mxu0 0.0
        %1210 = vmatprep.subr.mxu0 0.0
        %1211 = vmatpush1.msra.mxu0 0.0
        %1212 = vmatprep.subr.mxu0 0.0
        %1213 = vmatpush1.msra.mxu0 0.0
        %1214 = vmatprep.subr.mxu0 0.0
        %1215 = vmatpush1.msra.mxu0 0.0
        %1216 = vmatprep.subr.mxu0 0.0
        %1217 = vmatpush1.msra.mxu0 0.0
        %1218 = vmatprep.subr.mxu0 0.0
        %1219 = vmatpush1.msra.mxu0 0.0
        %1220 = vmatprep.subr.mxu0 0.0
        %1221 = vmatpush1.msra.mxu0 0.0
        %1222 = vmatprep.subr.mxu0 0.0
        %1223 = vmatpush1.msra.mxu0 0.0
        %1224 = vmatprep.subr.mxu0 0.0
        %1225 = vmatpush1.msra.mxu0 0.0
        %1226 = vmatprep.mubr.f32.mxu0 0.0
        %1227 = vmatmul.mubr.f32.gmra.mrb[0].mxu0 %v1160
        %v1228 = vpop.f32.mrb[0].mxu0
        %v1229 = vadd.f32 0.0, %v1228
        %v1230 = vpop.f32.mrb[0].mxu0
        %1231 = vdwg.mxu0
        %v1232 = vadd.f32 %v1073, %v1229
        %s1233 = scalar_lea.vmem %s6, 24
        %v1234 = vld [vmem:[%s1233] sm:$0xff]
        %v1235 = vmul.f32 %v762, %v1234
        %s1236 = scalar_lea.vmem [#allocation7], 96
        %v1237 = vld [vmem:[%s1236] sm:$0xff]
        %v1238 = vld [vmem:[%s1236 + $0x8] sm:$0xff]
        %v1239 = vld [vmem:[%s1236 + $0x10] sm:$0xff]
        %v1240 = vld [vmem:[%s1236 + $0x18] sm:$0xff]
        %v1242 = vsel %vm771, %v1235, 0
        %1244 = vmatprep.subr.mxu0 0.0
        %1245 = vmatpush1.msra.mxu0 %v1237
        %1246 = vmatprep.subr.mxu0 0.0
        %1247 = vmatpush1.msra.mxu0 %v1238
        %1248 = vmatprep.subr.mxu0 0.0
        %1249 = vmatpush1.msra.mxu0 %v1239
        %1250 = vmatprep.subr.mxu0 0.0
        %1251 = vmatpush1.msra.mxu0 %v1240
        %1252 = vmatprep.subr.mxu0 0.0
        %1253 = vmatpush1.msra.mxu0 0.0
        %1254 = vmatprep.subr.mxu0 0.0
        %1255 = vmatpush1.msra.mxu0 0.0
        %1256 = vmatprep.subr.mxu0 0.0
        %1257 = vmatpush1.msra.mxu0 0.0
        %1258 = vmatprep.subr.mxu0 0.0
        %1259 = vmatpush1.msra.mxu0 0.0
        %1260 = vmatprep.subr.mxu0 0.0
        %1261 = vmatpush1.msra.mxu0 0.0
        %1262 = vmatprep.subr.mxu0 0.0
        %1263 = vmatpush1.msra.mxu0 0.0
        %1264 = vmatprep.subr.mxu0 0.0
        %1265 = vmatpush1.msra.mxu0 0.0
        %1266 = vmatprep.subr.mxu0 0.0
        %1267 = vmatpush1.msra.mxu0 0.0
        %1268 = vmatprep.subr.mxu0 0.0
        %1269 = vmatpush1.msra.mxu0 0.0
        %1270 = vmatprep.subr.mxu0 0.0
        %1271 = vmatpush1.msra.mxu0 0.0
        %1272 = vmatprep.subr.mxu0 0.0
        %1273 = vmatpush1.msra.mxu0 0.0
        %1274 = vmatprep.subr.mxu0 0.0
        %1275 = vmatpush1.msra.mxu0 0.0
        %1276 = vmatprep.subr.mxu0 0.0
        %1277 = vmatpush1.msra.mxu0 0.0
        %1278 = vmatprep.subr.mxu0 0.0
        %1279 = vmatpush1.msra.mxu0 0.0
        %1280 = vmatprep.subr.mxu0 0.0
        %1281 = vmatpush1.msra.mxu0 0.0
        %1282 = vmatprep.subr.mxu0 0.0
        %1283 = vmatpush1.msra.mxu0 0.0
        %1284 = vmatprep.subr.mxu0 0.0
        %1285 = vmatpush1.msra.mxu0 0.0
        %1286 = vmatprep.subr.mxu0 0.0
        %1287 = vmatpush1.msra.mxu0 0.0
        %1288 = vmatprep.subr.mxu0 0.0
        %1289 = vmatpush1.msra.mxu0 0.0
        %1290 = vmatprep.subr.mxu0 0.0
        %1291 = vmatpush1.msra.mxu0 0.0
        %1292 = vmatprep.subr.mxu0 0.0
        %1293 = vmatpush1.msra.mxu0 0.0
        %1294 = vmatprep.subr.mxu0 0.0
        %1295 = vmatpush1.msra.mxu0 0.0
        %1296 = vmatprep.subr.mxu0 0.0
        %1297 = vmatpush1.msra.mxu0 0.0
        %1298 = vmatprep.subr.mxu0 0.0
        %1299 = vmatpush1.msra.mxu0 0.0
        %1300 = vmatprep.subr.mxu0 0.0
        %1301 = vmatpush1.msra.mxu0 0.0
        %1302 = vmatprep.subr.mxu0 0.0
        %1303 = vmatpush1.msra.mxu0 0.0
        %1304 = vmatprep.subr.mxu0 0.0
        %1305 = vmatpush1.msra.mxu0 0.0
        %1306 = vmatprep.subr.mxu0 0.0
        %1307 = vmatpush1.msra.mxu0 0.0
        %1308 = vmatprep.mubr.f32.mxu0 0.0
        %1309 = vmatmul.mubr.f32.gmra.mrb[0].mxu0 %v1242
        %v1310 = vpop.f32.mrb[0].mxu0
        %v1311 = vadd.f32 0.0, %v1310
        %v1312 = vpop.f32.mrb[0].mxu0
        %1313 = vdwg.mxu0
        %s1314 = scalar_lea.vmem [#allocation8], 24
        %v1315 = vld [vmem:[%s1314] sm:$0xff]
        %v1317 = vsel %vm929, %v1315, 0
        %1319 = vmatprep.subr.mxu0 0.0
        %1320 = vmatpush1.msra.mxu0 %v1311
        %1321 = vmatprep.subr.mxu0 0.0
        %1322 = vmatpush1.msra.mxu0 0.0
        %1323 = vmatprep.subr.mxu0 0.0
        %1324 = vmatpush1.msra.mxu0 0.0
        %1325 = vmatprep.subr.mxu0 0.0
        %1326 = vmatpush1.msra.mxu0 0.0
        %1327 = vmatprep.subr.mxu0 0.0
        %1328 = vmatpush1.msra.mxu0 0.0
        %1329 = vmatprep.subr.mxu0 0.0
        %1330 = vmatpush1.msra.mxu0 0.0
        %1331 = vmatprep.subr.mxu0 0.0
        %1332 = vmatpush1.msra.mxu0 0.0
        %1333 = vmatprep.subr.mxu0 0.0
        %1334 = vmatpush1.msra.mxu0 0.0
        %1335 = vmatprep.subr.mxu0 0.0
        %1336 = vmatpush1.msra.mxu0 0.0
        %1337 = vmatprep.subr.mxu0 0.0
        %1338 = vmatpush1.msra.mxu0 0.0
        %1339 = vmatprep.subr.mxu0 0.0
        %1340 = vmatpush1.msra.mxu0 0.0
        %1341 = vmatprep.subr.mxu0 0.0
        %1342 = vmatpush1.msra.mxu0 0.0
        %1343 = vmatprep.subr.mxu0 0.0
        %1344 = vmatpush1.msra.mxu0 0.0
        %1345 = vmatprep.subr.mxu0 0.0
        %1346 = vmatpush1.msra.mxu0 0.0
        %1347 = vmatprep.subr.mxu0 0.0
        %1348 = vmatpush1.msra.mxu0 0.0
        %1349 = vmatprep.subr.mxu0 0.0
        %1350 = vmatpush1.msra.mxu0 0.0
        %1351 = vmatprep.subr.mxu0 0.0
        %1352 = vmatpush1.msra.mxu0 0.0
        %1353 = vmatprep.subr.mxu0 0.0
        %1354 = vmatpush1.msra.mxu0 0.0
        %1355 = vmatprep.subr.mxu0 0.0
        %1356 = vmatpush1.msra.mxu0 0.0
        %1357 = vmatprep.subr.mxu0 0.0
        %1358 = vmatpush1.msra.mxu0 0.0
        %1359 = vmatprep.subr.mxu0 0.0
        %1360 = vmatpush1.msra.mxu0 0.0
        %1361 = vmatprep.subr.mxu0 0.0
        %1362 = vmatpush1.msra.mxu0 0.0
        %1363 = vmatprep.subr.mxu0 0.0
        %1364 = vmatpush1.msra.mxu0 0.0
        %1365 = vmatprep.subr.mxu0 0.0
        %1366 = vmatpush1.msra.mxu0 0.0
        %1367 = vmatprep.subr.mxu0 0.0
        %1368 = vmatpush1.msra.mxu0 0.0
        %1369 = vmatprep.subr.mxu0 0.0
        %1370 = vmatpush1.msra.mxu0 0.0
        %1371 = vmatprep.subr.mxu0 0.0
        %1372 = vmatpush1.msra.mxu0 0.0
        %1373 = vmatprep.subr.mxu0 0.0
        %1374 = vmatpush1.msra.mxu0 0.0
        %1375 = vmatprep.subr.mxu0 0.0
        %1376 = vmatpush1.msra.mxu0 0.0
        %1377 = vmatprep.subr.mxu0 0.0
        %1378 = vmatpush1.msra.mxu0 0.0
        %1379 = vmatprep.subr.mxu0 0.0
        %1380 = vmatpush1.msra.mxu0 0.0
        %1381 = vmatprep.subr.mxu0 0.0
        %1382 = vmatpush1.msra.mxu0 0.0
        %1383 = vmatprep.mubr.f32.mxu0 0.0
        %1384 = vmatmul.mubr.f32.gmra.mrb[0].mxu0 %v1317
        %v1385 = vpop.f32.mrb[0].mxu0
        %v1386 = vadd.f32 0.0, %v1385
        %v1387 = vpop.f32.mrb[0].mxu0
        %1388 = vdwg.mxu0
        %v1389 = vadd.f32 %v1232, %v1386
        %v1390 = vld [vmem:[%s8] sm:$0x1]
        %v1392 = vlaneseq
        %v1393 = vshrl.u32 %v1392, 7
        %v1394 = vsub.s32 0, %v1393
        %v1395 = vrot.slane %v1390, %v1394
        %v1397 = vadd.f32 %v1389, %v1395
        %1398 = vst.msk [vmem:[%s391] sm:$0xff] %vm771, %v1397
        %s1399 = sand.u32 %s230, 1
        %s1400 = scalar_lea.sflag [#allocation4], %s1399
        %s1401 = sand.u32 %s230, 1
        %s1402 = smul.addr %s1401, 8
        %s1403 = scalar_lea.vmem [#allocation10], %s1402
        // Predicated region
        $region73: #{tpu_custom_call.1} parent=55 // pred_check
          %p1404 = pneg %p240
        $region74: #{tpu_custom_call.1} parent=55 // pred_check_branch
          %1406 = sbr.rel (%p1404) target = $region76
        $region75: #{tpu_custom_call.1} parent=55 // pred_region
          %s1408 = ssub.s32 128, 128
          %1409 = vsyncadd %s1400, %s1408
          %s1410 = smul.addr %s28, 128
          %s1411 = scalar_lea.hbm %s9, %s1410
          %s1413 = sshll.u32 %s1403, 4
          %s1414 = int_to_ptr.vmem [resolvable:$true] %s1413
          %1416 = dma.vmem_to_hbm [thread:$0]  %s1414, 128, %s1411, %s1400
        $region76: #{tpu_custom_call.1} parent=55 // pred_fallthru
          _
      $region56: #{tpu_custom_call.1} parent=5 // pred_fallthru
        _
      %p1417 = scmp.le.s32.totalorder 2, %s23
      // Predicated region
      $region77: #{tpu_custom_call.1} parent=5 // pred_check
        %p1418 = pneg %p1417
      $region78: #{tpu_custom_call.1} parent=5 // pred_check_branch
        %1420 = sbr.rel (%p1418) target = $region80
      $region79: #{tpu_custom_call.1} parent=5 // pred_region
        %s1421 = ssub.s32 %s23, 2
        // Predicated region
        $region81: #{tpu_custom_call.1} parent=79 // pred_check
          %p1422 = pneg %p246
        $region82: #{tpu_custom_call.1} parent=79 // pred_check_branch
          %1424 = sbr.rel (%p1422) target = $region84
        $region83: #{tpu_custom_call.1} parent=79 // pred_region
          %s1425 = sand.u32 %s231, 1
          %s1426 = scalar_lea.sflag [#allocation4], %s1425
          %s1427 = sand.u32 %s231, 1
          %s1428 = smul.addr %s1427, 8
          %s1429 = scalar_lea.vmem [#allocation10], %s1428
          %1430 = dma.done %s1426, 128
        $region84: #{tpu_custom_call.1} parent=79 // pred_fallthru
          _
      $region80: #{tpu_custom_call.1} parent=5 // pred_fallthru
        _
    $region6: #{tpu_custom_call.1} parent=1 // loop_footer
      %s27 = sadd.s32 1, %s23
    $region7: #{tpu_custom_call.1} parent=1 // loop_footer_branch
      %22 = sbr.rel target = $region3
    $region8: #{tpu_custom_call.1} parent=1 // loop_exit
      _
    %1431 = vsyncpa [#allocation3], 1
    %s1432 = scalar_lea.sflag [#allocation3], 1
    %1433 = vsyncpa %s1432, 1
    %1434 = vsyncpa [#allocation6], 1
    %1435 = vsyncpa [#allocation9], 1
    %1436 = vsyncpa [#allocation4], 1
    %s1437 = scalar_lea.sflag [#allocation4], 1
    %1438 = vsyncpa %s1437, 1

</llo_original>
